<compile_context>
chip_gen: v5e
topology: v5e:2x2
jax: 0.10.0
libtpu: 0.0.40
codegen_flags: <defaults>
</compile_context>

<pallas_src>
import functools

import jax
import jax.numpy as jnp
from jax import lax
from jax.experimental import pallas as pl
from jax.experimental.pallas import tpu as pltpu


def _fc_kernel(x_ref, w_ref, b_ref, classes_ref):
    # x_ref:       (TILE_N, in_size)      VMEM (streamed tile of instances)
    # w_ref:       (n_classes, in_size)   VMEM (resident, PyTorch layout)
    # b_ref:       (1, n_classes)         VMEM (resident, f32 bias)
    # classes_ref: (TILE_N, n_classes)    VMEM (output tile)
    acc = lax.dot_general(
        x_ref[...],
        w_ref[...],
        dimension_numbers=(((1,), (1,)), ((), ())),  # x @ W.T on the MXU
        preferred_element_type=jnp.float32,
    )
    classes_ref[...] = (acc + b_ref[...]).astype(classes_ref.dtype)


def _round_down(v, m):
    return max(m, (v // m) * m)


def fc_layer_forward(x, weight, bias, *, tile_n=2048, compute_dtype=None):
    """Pallas equivalent of FCLayer.forward.

    Args:
      x:      [N, in_size] (instances of a MIL bag on rows), f32 or bf16.
      weight: [n_classes, in_size] (PyTorch nn.Linear layout).
      bias:   [n_classes].
      tile_n: rows per grid step (sublane aligned; 1024-2048 amortizes
        per-step pipeline overhead).  Auto-shrunk to fit VMEM / keep >= 2
        grid steps.
      compute_dtype: explicit opt-in streaming dtype (e.g. jnp.bfloat16).
        Results then deviate from the f32 reference by ~1e-2 relative;
        accumulation stays f32.
    Returns:
      (feats, classes): feats is x (pass-through), classes is [N, n_classes].
    """
    n, in_size = x.shape
    n_classes = weight.shape[0]
    out_dtype = x.dtype

    cdt = jnp.dtype(compute_dtype) if compute_dtype is not None else jnp.dtype(x.dtype)
    isz_in = cdt.itemsize
    isz_out = jnp.dtype(out_dtype).itemsize

    # Tiny-shape fallback: a standalone pallas_call has several us of launch +
    # pipeline fixed cost; let XLA fuse sub-MiB matmuls instead.
    if n * in_size * isz_in < (1 << 20) or n < 32:
        return x, (x @ weight.T + bias).astype(out_dtype)

    x_in = x if x.dtype == cdt else x.astype(cdt)
    w_in = weight if weight.dtype == cdt else weight.astype(cdt)
    b2d = bias.reshape(1, n_classes).astype(jnp.float32)

    # Sublane-aligned row tile; keep the grid >= 2 steps so ("parallel",)
    # can shard across both v7x TensorCores (no-op on v5e/v6e).
    sub = 16 if cdt == jnp.dtype(jnp.bfloat16) else 8
    tn = min(int(tile_n), n)
    if n >= 2 * sub:
        tn = min(tn, pl.cdiv(n, 2))
    tn = _round_down(tn, sub)

    # Generation-aware VMEM budget: ~3/4 of physical VMEM (48 MiB on v7x's
    # 64 MiB; 96 MiB on v5e/v6e's 128 MiB).
    try:
        vmem_cap = int(pltpu.get_tpu_info().vmem_capacity_bytes)
    except Exception:  # no TPU info available -> assume the smallest (v7x)
        vmem_cap = 64 << 20
    budget = max(32 << 20, (vmem_cap * 3) // 4)
    headroom = 4 << 20
    w_bytes = n_classes * in_size * isz_in

    def footprint(t):
        return (2 * t * in_size * isz_in        # double-buffered x tiles
                + 2 * t * n_classes * isz_out   # double-buffered output tiles
                + 2 * w_bytes                   # weight (conservatively 2 bufs)
                + 2 * 128 * 4)                  # bias

    # Shrink tn (never the vmem limit) until the pipeline footprint fits.
    while tn > sub and footprint(tn) + headroom > budget:
        tn = _round_down(tn // 2, sub)
    # TODO(synk): for in_size so large that even tn==sub does not fit, add a K
    # grid axis with an f32 VMEM accumulator ("arbitrary" reduction dim).
    vmem_limit = int(min(budget, max(32 << 20, footprint(tn) + headroom)))

    grid = (pl.cdiv(n, tn),)

    # Resident weight/bias (constant index_map).  Single-buffer them only when
    # the dead second buffer would cost meaningful VMEM (> 1 MiB); for tiny
    # weights the default double buffer is harmless.
    def _resident_spec(shape):
        idx = lambda i: (0,) * len(shape)
        if 2 * w_bytes > (1 << 20):
            try:
                return pl.BlockSpec(shape, idx, pipeline_mode=pl.Buffered(1))
            except TypeError:
                pass
        return pl.BlockSpec(shape, idx)

    cost = pl.CostEstimate(
        flops=2 * n * in_size * n_classes,
        transcendentals=0,
        bytes_accessed=(n * in_size * isz_in        # x read
                        + w_bytes                   # weight read
                        + n_classes * 4             # bias read
                        + n * n_classes * isz_out), # classes write
    )

    classes = pl.pallas_call(
        _fc_kernel,
        out_shape=jax.ShapeDtypeStruct((n, n_classes), out_dtype),
        grid=grid,
        in_specs=[
            pl.BlockSpec((tn, in_size), lambda i: (i, 0)),  # streamed x
            _resident_spec((n_classes, in_size)),           # resident W
            _resident_spec((1, n_classes)),                 # resident b
        ],
        out_specs=pl.BlockSpec((tn, n_classes), lambda i: (i, 0)),
        compiler_params=pltpu.CompilerParams(
            dimension_semantics=("parallel",),
            vmem_limit_bytes=vmem_limit,
        ),
        cost_estimate=cost,
    )(x_in, w_in, b2d)

    feats = x  # pass-through, no compute / no copy
    return feats, classes


if __name__ == "__main__":
    key = jax.random.PRNGKey(0)
    k_x, k_w, k_b = jax.random.split(key, 3)

    # Shapes consistent with dsmil usage: N instances per bag, in_size
    # features, n_classes logits.  x is 2 MiB so the Pallas path (grid of
    # >= 2 row tiles, one per v7x TensorCore) is exercised.
    N, IN_SIZE, N_CLASSES = 1024, 512, 2

    x = jax.random.normal(k_x, (N, IN_SIZE), dtype=jnp.float32)
    # Deterministic "Linear" parameters (PyTorch layout: [out, in]).
    weight = jax.random.normal(k_w, (N_CLASSES, IN_SIZE), dtype=jnp.float32) * 0.1
    bias = jax.random.normal(k_b, (N_CLASSES,), dtype=jnp.float32) * 0.1

    fwd = jax.jit(functools.partial(fc_layer_forward, tile_n=2048))
    feats, classes = fwd(x, weight, bias)
    jax.block_until_ready((feats, classes))

    # Reference check in plain JAX.
    ref_classes = x @ weight.T + bias
    assert feats.shape == (N, IN_SIZE)
    assert classes.shape == (N, N_CLASSES)
    assert jnp.allclose(classes, ref_classes, atol=1e-4, rtol=1e-4)
    assert jnp.array_equal(feats, x)

    # Also exercise the tiny-shape fallback path (no Pallas launch).
    xs = jax.random.normal(k_x, (4, 16), dtype=jnp.float32)
    ws = jax.random.normal(k_w, (N_CLASSES, 16), dtype=jnp.float32)
    bs = jax.random.normal(k_b, (N_CLASSES,), dtype=jnp.float32)
    f_s, c_s = fc_layer_forward(xs, ws, bs)
    assert jnp.allclose(c_s, xs @ ws.T + bs, atol=1e-5, rtol=1e-5)
    assert jnp.array_equal(f_s, xs)

    print("KERNEL_OK")
</pallas_src>

<mosaic_0001>
module attributes {stable_mosaic.version = 11 : i64} {
  func.func @_fc_kernel(%arg0: i32, %arg1: memref<512x512xf32, #tpu.memory_space<vmem>>, %arg2: memref<2x512xf32, #tpu.memory_space<vmem>>, %arg3: memref<1x2xf32, #tpu.memory_space<vmem>>, %arg4: memref<512x2xf32, #tpu.memory_space<vmem>>) attributes {dimension_semantics = [#tpu.dimension_semantics<parallel>], iteration_bounds = array<i64: 2>, scalar_prefetch = 0 : i64, scratch_operands = 0 : i64, tpu.core_type = #tpu.core_type<tc>, window_params = [{transform_indices = @transform_0, window_bounds = array<i64: 512, 512>}, {pipeline_mode = #tpu.pipeline_mode<synchronous>, transform_indices = @transform_1, window_bounds = array<i64: 2, 512>}, {pipeline_mode = #tpu.pipeline_mode<synchronous>, transform_indices = @transform_2, window_bounds = array<i64: 1, 2>}, {transform_indices = @transform_3, window_bounds = array<i64: 512, 2>}]} {
    %c0 = arith.constant 0 : index
    %c0_0 = arith.constant 0 : index
    %0 = vector.load %arg1[%c0, %c0_0] : memref<512x512xf32, #tpu.memory_space<vmem>>, vector<512x512xf32>
    %c0_1 = arith.constant 0 : index
    %c0_2 = arith.constant 0 : index
    %1 = vector.load %arg2[%c0_1, %c0_2] : memref<2x512xf32, #tpu.memory_space<vmem>>, vector<2x512xf32>
    %cst = arith.constant dense<0.000000e+00> : vector<512x2xf32>
    %2 = tpu.matmul %0, %1, %cst {dimension_numbers = #tpu.dot_dimension_numbers<[1], [1], [0], [0], [0, 0, 1, 0], [], []>} : vector<512x512xf32>, vector<2x512xf32>, vector<512x2xf32> -> vector<512x2xf32>
    %c0_3 = arith.constant 0 : index
    %c0_4 = arith.constant 0 : index
    %3 = vector.load %arg3[%c0_3, %c0_4] : memref<1x2xf32, #tpu.memory_space<vmem>>, vector<1x2xf32>
    %4 = vector.broadcast %3 : vector<1x2xf32> to vector<512x2xf32>
    %5 = arith.addf %2, %4 : vector<512x2xf32>
    %c0_5 = arith.constant 0 : index
    %c0_6 = arith.constant 0 : index
    %6 = vector.load %arg4[%c0_5, %c0_6] : memref<512x2xf32, #tpu.memory_space<vmem>>, vector<512x2xf32>
    tpu.vector_store %arg4[%c0_5, %c0_6], %5 {strides = array<i32>} : memref<512x2xf32, #tpu.memory_space<vmem>>, vector<512x2xf32>,
    return
  }
  func.func @transform_0(%arg0: i32) -> (i32, i32) {
    %c0_i32 = arith.constant 0 : i32
    %c0_i32_0 = arith.constant 0 : i32
    return %arg0, %c0_i32 : i32, i32
  }
  func.func @transform_1(%arg0: i32) -> (i32, i32) {
    %c0_i32 = arith.constant 0 : i32
    %c0_i32_0 = arith.constant 0 : i32
    %c0_i32_1 = arith.constant 0 : i32
    return %c0_i32, %c0_i32_0 : i32, i32
  }
  func.func @transform_2(%arg0: i32) -> (i32, i32) {
    %c0_i32 = arith.constant 0 : i32
    %c0_i32_0 = arith.constant 0 : i32
    %c0_i32_1 = arith.constant 0 : i32
    return %c0_i32, %c0_i32_0 : i32, i32
  }
  func.func @transform_3(%arg0: i32) -> (i32, i32) {
    %c0_i32 = arith.constant 0 : i32
    %c0_i32_0 = arith.constant 0 : i32
    return %arg0, %c0_i32 : i32, i32
  }
}

</mosaic_0001>

<llo_original>
// kernel: fc_layer_forward.1
$region0: #{fc_layer_forward.1}
  #allocation0 [shape = 'u32[]', space=smem, size = 0x4, offset = 0x4, fixed_abs, tag = 'smem constant byte address 0x4 - core index']
  #allocation1 [shape = 'u32[72,128]{1,0:T(1,128)}', space=vmem, size = 0x9000, scoped, tag = 'internal scratch']
  %s0 = inlined_call_operand.hbm [shape: f32[1024,512], index: 0, kind: input, shape index: {}]
  %s1 = inlined_call_operand.hbm [shape: f32[2,512], index: 1, kind: input, shape index: {}]
  %s2 = inlined_call_operand.hbm [shape: f32[1,2], index: 2, kind: input, shape index: {}]
  %s3 = inlined_call_operand.vmem [shape: f32[1024,2], index: 3, kind: output, shape index: {}]
  %s4 = sld [smem:[#allocation0]]
  $region57: #{fc_layer_forward.1} parent=0
    _
  %s6 = ssub.s32 1, %s4
  %s7 = scalar_select 0, %s6, %s4
  $region1: #{fc_layer_forward.1} parent=0
    #allocation2 [shape = 'u8[2097152]{0}', space=vmem, size = 0x200000, scoped, tag = 'input window, operand 0']
    #allocation3 [shape = 's32[2]{0}', space=sflag, size = 0x8, scoped, tag = 'scoped memory for fc_layer_forward.1']
    #allocation4 [shape = 'u8[4096]{0}', space=vmem, size = 0x1000, scoped, tag = 'input window, operand 1, single buffered']
    #allocation5 [shape = 's32[1]{0}', space=sflag, size = 0x4, scoped, tag = 'scoped memory for fc_layer_forward.1']
    #allocation6 [shape = 'u8[512]{0}', space=vmem, size = 0x400, scoped, tag = 'input window, operand 2, single buffered']
    %8 = vsyncpa [#allocation3], 0
    %s9 = scalar_lea.sflag [#allocation3], 1
    %10 = vsyncpa %s9, 0
    %11 = vsyncpa [#allocation5], 0
    loop: start=0, step=1, limit=4
    $region2: #{fc_layer_forward.1} parent=1 // loop_pre_header
      _
    $region3: #{fc_layer_forward.1} parent=1 // loop_header
      %s13 = sphi 0, %s17
      %p14 = scmp.ge.s32.totalorder %s13, 4
      %s23 = sphi 0, %s25
      %s26 = sphi 0, %s23
      %s27 = sphi 0, %s26
      %s43 = sphi 0, %s27
      %s47 = sphi 0, %s47
      %s49 = sphi 0, %s47
      %s50 = sphi 0, %s49
      %s64 = sphi 0, %s50
      %s68 = sphi 0, %s68
      %s70 = sphi 0, %s68
      %s71 = sphi 0, %s70
      %s85 = sphi 0, %s71
      %s91 = sphi 0, %s93
      %s94 = sphi 0, %s91
      %s95 = sphi 0, %s94
      %s111 = sphi 0, %s95
    $region4: #{fc_layer_forward.1} parent=1 // loop_header_branch
      %16 = sbr.rel (%p14) target = $region8
    $region5: #{fc_layer_forward.1} parent=1 // loop_body
      %s18 = ssub.s32 %s13, 1
      %s19 = ssub.s32 %s13, 2
      %s20 = sadd.s32 %s13, 1
      %s21 = ssub.s32 %s13, %s20
      %p22 = scmp.eq.s32.totalorder %s21, 0
      %s24 = sadd.s32 %s23, 1
      %s25 = scalar_select %p22, %s23, %s24
      %p28 = pneg %p22
      %p29 = scmp.eq.s32.totalorder %s13, 1
      %p30 = por %p28, %p29
      %p31 = scmp.ne.s32.totalorder %s23, %s26
      %p32 = scmp.eq.s32.totalorder %s13, 0
      %p33 = por %p31, %p32
      %p34 = scmp.ne.s32.totalorder %s23, %s26
      %p35 = scmp.eq.s32.totalorder %s18, 1
      %p36 = por %p34, %p35
      %p37 = scmp.ne.s32.totalorder %s26, %s27
      %p38 = scmp.eq.s32.totalorder %s18, 0
      %p39 = por %p37, %p38
      %p40 = scmp.ne.s32.totalorder %s26, %s27
      %p41 = scmp.eq.s32.totalorder %s19, 1
      %p42 = por %p40, %p41
      %p44 = scmp.ne.s32.totalorder %s27, %s43
      %p45 = scmp.eq.s32.totalorder %s19, 0
      %p46 = por %p44, %p45
      %s48 = sadd.s32 %s47, 1
      %p51 = scmp.eq.s32.totalorder %s13, 1
      %p52 = scmp.ne.s32.totalorder %s47, %s49
      %p53 = scmp.eq.s32.totalorder %s13, 0
      %p54 = por %p52, %p53
      %p55 = scmp.ne.s32.totalorder %s47, %s49
      %p56 = scmp.eq.s32.totalorder %s18, 1
      %p57 = por %p55, %p56
      %p58 = scmp.ne.s32.totalorder %s49, %s50
      %p59 = scmp.eq.s32.totalorder %s18, 0
      %p60 = por %p58, %p59
      %p61 = scmp.ne.s32.totalorder %s49, %s50
      %p62 = scmp.eq.s32.totalorder %s19, 1
      %p63 = por %p61, %p62
      %p65 = scmp.ne.s32.totalorder %s50, %s64
      %p66 = scmp.eq.s32.totalorder %s19, 0
      %p67 = por %p65, %p66
      %s69 = sadd.s32 %s68, 1
      %p72 = scmp.eq.s32.totalorder %s13, 1
      %p73 = scmp.ne.s32.totalorder %s68, %s70
      %p74 = scmp.eq.s32.totalorder %s13, 0
      %p75 = por %p73, %p74
      %p76 = scmp.ne.s32.totalorder %s68, %s70
      %p77 = scmp.eq.s32.totalorder %s18, 1
      %p78 = por %p76, %p77
      %p79 = scmp.ne.s32.totalorder %s70, %s71
      %p80 = scmp.eq.s32.totalorder %s18, 0
      %p81 = por %p79, %p80
      %p82 = scmp.ne.s32.totalorder %s70, %s71
      %p83 = scmp.eq.s32.totalorder %s19, 1
      %p84 = por %p82, %p83
      %p86 = scmp.ne.s32.totalorder %s71, %s85
      %p87 = scmp.eq.s32.totalorder %s19, 0
      %p88 = por %p86, %p87
      %s89 = ssub.s32 %s13, %s20
      %p90 = scmp.eq.s32.totalorder %s89, 0
      %s92 = sadd.s32 %s91, 1
      %s93 = scalar_select %p90, %s91, %s92
      %p96 = pneg %p90
      %p97 = scmp.eq.s32.totalorder %s13, 1
      %p98 = por %p96, %p97
      %p99 = scmp.ne.s32.totalorder %s91, %s94
      %p100 = scmp.eq.s32.totalorder %s13, 0
      %p101 = por %p99, %p100
      %p102 = scmp.ne.s32.totalorder %s91, %s94
      %p103 = scmp.eq.s32.totalorder %s18, 1
      %p104 = por %p102, %p103
      %p105 = scmp.ne.s32.totalorder %s94, %s95
      %p106 = scmp.eq.s32.totalorder %s18, 0
      %p107 = por %p105, %p106
      %p108 = scmp.ne.s32.totalorder %s94, %s95
      %p109 = scmp.eq.s32.totalorder %s19, 1
      %p110 = por %p108, %p109
      %p112 = scmp.ne.s32.totalorder %s95, %s111
      %p113 = scmp.eq.s32.totalorder %s19, 0
      %p114 = por %p112, %p113
      %p115 = scmp.le.s32.totalorder 1, %s13
      %p116 = scmp.lt.s32.totalorder %s13, 3
      %p117 = pnand %p115, %p116
      %p118 = pneg %p117
      // Predicated region
      $region9: #{fc_layer_forward.1} parent=5 // pred_check
        _
      $region10: #{fc_layer_forward.1} parent=5 // pred_check_branch
        %120 = sbr.rel (%p117) target = $region12
      $region11: #{fc_layer_forward.1} parent=5 // pred_region
        %s121 = ssub.s32 %s13, 1
        // Predicated region
        $region13: #{fc_layer_forward.1} parent=11 // pred_check
          %p122 = pneg %p60
        $region14: #{fc_layer_forward.1} parent=11 // pred_check_branch
          %124 = sbr.rel (%p122) target = $region16
        $region15: #{fc_layer_forward.1} parent=11 // pred_region
          %126 = vsyncadd [#allocation5], 0
          %s128 = sshll.u32 %s1, 4
          %s129 = int_to_ptr.hbm [resolvable:$true] %s128
          %s130 = sshll.u32 [#allocation4], 4
          %s131 = int_to_ptr.vmem [resolvable:$true] %s130
          %133 = dma.hbm_to_vmem [thread:$0]  %s129, 128, %s131, [#allocation5]
        $region16: #{fc_layer_forward.1} parent=11 // pred_fallthru
          _
        // Predicated region
        $region17: #{fc_layer_forward.1} parent=11 // pred_check
          %p134 = pneg %p81
        $region18: #{fc_layer_forward.1} parent=11 // pred_check_branch
          %136 = sbr.rel (%p134) target = $region20
        $region19: #{fc_layer_forward.1} parent=11 // pred_region
          %138 = vsyncadd [#allocation5], 0
          %s140 = sshll.u32 %s2, 4
          %s141 = int_to_ptr.hbm [resolvable:$true] %s140
          %s142 = sshll.u32 [#allocation6], 4
          %s143 = int_to_ptr.vmem [resolvable:$true] %s142
          %145 = dma.hbm_to_vmem [thread:$0]  %s141, 16, %s143, [#allocation5]
        $region20: #{fc_layer_forward.1} parent=11 // pred_fallthru
          _
      $region12: #{fc_layer_forward.1} parent=5 // pred_fallthru
        _
      %p146 = scmp.lt.s32.totalorder %s13, 2
      // Predicated region
      $region21: #{fc_layer_forward.1} parent=5 // pred_check
        %p147 = pneg %p146
      $region22: #{fc_layer_forward.1} parent=5 // pred_check_branch
        %149 = sbr.rel (%p147) target = $region24
      $region23: #{fc_layer_forward.1} parent=5 // pred_region
        // Predicated region
        $region25: #{fc_layer_forward.1} parent=23 // pred_check
          %p150 = pneg %p33
        $region26: #{fc_layer_forward.1} parent=23 // pred_check_branch
          %152 = sbr.rel (%p150) target = $region28
        $region27: #{fc_layer_forward.1} parent=23 // pred_region
          %s153 = sand.u32 %s23, 1
          %s154 = scalar_lea.sflag [#allocation3], %s153
          %s155 = sand.u32 %s23, 1
          %s156 = smul.addr %s155, 2048
          %s157 = scalar_lea.vmem [#allocation2], %s156
          %s158 = smul.u32 64, %s13
          %160 = vsyncadd %s154, 0
          %s161 = smul.addr %s158, 4
          %s162 = smul.addr %s161, 8
          %s163 = scalar_lea.hbm %s0, %s162
          %s164 = sshll.u32 %s163, 4
          %s165 = int_to_ptr.hbm [resolvable:$true] %s164
          %s166 = sshll.u32 %s157, 4
          %s167 = int_to_ptr.vmem [resolvable:$true] %s166
          %172 = dma.hbm_to_vmem [thread:$0]  %s165, 32768, %s167, %s154, 512, 512, 32
        $region28: #{fc_layer_forward.1} parent=23 // pred_fallthru
          _
      $region24: #{fc_layer_forward.1} parent=5 // pred_fallthru
        _
      %p173 = scmp.le.s32.totalorder 1, %s13
      %p174 = scmp.lt.s32.totalorder %s13, 3
      %p175 = pnand %p173, %p174
      %p176 = pneg %p175
      // Predicated region
      $region29: #{fc_layer_forward.1} parent=5 // pred_check
        _
      $region30: #{fc_layer_forward.1} parent=5 // pred_check_branch
        %178 = sbr.rel (%p175) target = $region32
      $region31: #{fc_layer_forward.1} parent=5 // pred_region
        %s179 = ssub.s32 %s13, 1
        %s180 = sand.u32 %s26, 1
        %s181 = scalar_lea.sflag [#allocation3], %s180
        %s182 = sand.u32 %s26, 1
        %s183 = smul.addr %s182, 2048
        %s184 = scalar_lea.vmem [#allocation2], %s183
        // Predicated region
        $region33: #{fc_layer_forward.1} parent=31 // pred_check
          %p185 = pneg %p39
        $region34: #{fc_layer_forward.1} parent=31 // pred_check_branch
          %187 = sbr.rel (%p185) target = $region36
        $region35: #{fc_layer_forward.1} parent=31 // pred_region
          %189 = dma.done %s181, 32768
        $region36: #{fc_layer_forward.1} parent=31 // pred_fallthru
          _
        // Predicated region
        $region37: #{fc_layer_forward.1} parent=31 // pred_check
          %p190 = pneg %p60
        $region38: #{fc_layer_forward.1} parent=31 // pred_check_branch
          %192 = sbr.rel (%p190) target = $region40
        $region39: #{fc_layer_forward.1} parent=31 // pred_region
          %194 = dma.done [#allocation5], 128
        $region40: #{fc_layer_forward.1} parent=31 // pred_fallthru
          _
        // Predicated region
        $region41: #{fc_layer_forward.1} parent=31 // pred_check
          %p195 = pneg %p81
        $region42: #{fc_layer_forward.1} parent=31 // pred_check_branch
          %197 = sbr.rel (%p195) target = $region44
        $region43: #{fc_layer_forward.1} parent=31 // pred_region
          %199 = dma.done [#allocation5], 16
        $region44: #{fc_layer_forward.1} parent=31 // pred_fallthru
          _
        %s200 = sand.u32 %s26, 1
        %s201 = scalar_lea.sflag [#allocation3], %s200
        %s202 = sand.u32 %s26, 1
        %s203 = smul.addr %s202, 2048
        %s204 = scalar_lea.vmem [#allocation2], %s203
        %p205 = pneg %p39
        %p206 = pneg %p36
        %p207 = pneg %p60
        %p208 = pneg %p57
        %p209 = pneg %p81
        %p210 = pneg %p78
        %p211 = pneg %p107
        %p212 = pneg %p104
        %s213 = smul.u32 64, %s18
        %p214 = scmp.lt.s32.totalorder %s213, 127
        %s215 = scalar_select %p214, %s213, 127
        %s216 = smul.addr %s215, 8
        %s217 = scalar_lea.vmem %s3, %s216
        %s218 = smul.u32 64, %s18
        %s219 = smul.u32 64, %s18
        %p220 = scmp.lt.s32.totalorder %s219, 127
        %s221 = scalar_select %p220, %s219, 127
        %s222 = smul.addr %s221, 8
        %s223 = scalar_lea.vmem %s3, %s222
        %s224 = smul.u32 64, %s18
        %v225 = vld [vmem:[%s184] sm:$0xff]
        %v226 = vld [vmem:[%s184 + $0x8] sm:$0xff]
        %v227 = vld [vmem:[%s184 + $0x10] sm:$0xff]
        %v228 = vld [vmem:[%s184 + $0x18] sm:$0xff]
        %v229 = vld [vmem:[%s184 + $0x20] sm:$0xff]
        %v230 = vld [vmem:[%s184 + $0x28] sm:$0xff]
        %v231 = vld [vmem:[%s184 + $0x30] sm:$0xff]
        %v232 = vld [vmem:[%s184 + $0x38] sm:$0xff]
        %v233 = vld [vmem:[%s184 + $0x40] sm:$0xff]
        %v234 = vld [vmem:[%s184 + $0x48] sm:$0xff]
        %v235 = vld [vmem:[%s184 + $0x50] sm:$0xff]
        %v236 = vld [vmem:[%s184 + $0x58] sm:$0xff]
        %v237 = vld [vmem:[%s184 + $0x60] sm:$0xff]
        %v238 = vld [vmem:[%s184 + $0x68] sm:$0xff]
        %v239 = vld [vmem:[%s184 + $0x70] sm:$0xff]
        %v240 = vld [vmem:[%s184 + $0x78] sm:$0xff]
        %v241 = vld [vmem:[%s184 + $0x80] sm:$0xff]
        %v242 = vld [vmem:[%s184 + $0x88] sm:$0xff]
        %v243 = vld [vmem:[%s184 + $0x90] sm:$0xff]
        %v244 = vld [vmem:[%s184 + $0x98] sm:$0xff]
        %v245 = vld [vmem:[%s184 + $0xa0] sm:$0xff]
        %v246 = vld [vmem:[%s184 + $0xa8] sm:$0xff]
        %v247 = vld [vmem:[%s184 + $0xb0] sm:$0xff]
        %v248 = vld [vmem:[%s184 + $0xb8] sm:$0xff]
        %v249 = vld [vmem:[%s184 + $0xc0] sm:$0xff]
        %v250 = vld [vmem:[%s184 + $0xc8] sm:$0xff]
        %v251 = vld [vmem:[%s184 + $0xd0] sm:$0xff]
        %v252 = vld [vmem:[%s184 + $0xd8] sm:$0xff]
        %v253 = vld [vmem:[%s184 + $0xe0] sm:$0xff]
        %v254 = vld [vmem:[%s184 + $0xe8] sm:$0xff]
        %v255 = vld [vmem:[%s184 + $0xf0] sm:$0xff]
        %v256 = vld [vmem:[%s184 + $0xf8] sm:$0xff]
        %v257 = vld [vmem:[%s184 + $0x100] sm:$0xff]
        %v258 = vld [vmem:[%s184 + $0x108] sm:$0xff]
        %v259 = vld [vmem:[%s184 + $0x110] sm:$0xff]
        %v260 = vld [vmem:[%s184 + $0x118] sm:$0xff]
        %v261 = vld [vmem:[%s184 + $0x120] sm:$0xff]
        %v262 = vld [vmem:[%s184 + $0x128] sm:$0xff]
        %v263 = vld [vmem:[%s184 + $0x130] sm:$0xff]
        %v264 = vld [vmem:[%s184 + $0x138] sm:$0xff]
        %v265 = vld [vmem:[%s184 + $0x140] sm:$0xff]
        %v266 = vld [vmem:[%s184 + $0x148] sm:$0xff]
        %v267 = vld [vmem:[%s184 + $0x150] sm:$0xff]
        %v268 = vld [vmem:[%s184 + $0x158] sm:$0xff]
        %v269 = vld [vmem:[%s184 + $0x160] sm:$0xff]
        %v270 = vld [vmem:[%s184 + $0x168] sm:$0xff]
        %v271 = vld [vmem:[%s184 + $0x170] sm:$0xff]
        %v272 = vld [vmem:[%s184 + $0x178] sm:$0xff]
        %v273 = vld [vmem:[%s184 + $0x180] sm:$0xff]
        %v274 = vld [vmem:[%s184 + $0x188] sm:$0xff]
        %v275 = vld [vmem:[%s184 + $0x190] sm:$0xff]
        %v276 = vld [vmem:[%s184 + $0x198] sm:$0xff]
        %v277 = vld [vmem:[%s184 + $0x1a0] sm:$0xff]
        %v278 = vld [vmem:[%s184 + $0x1a8] sm:$0xff]
        %v279 = vld [vmem:[%s184 + $0x1b0] sm:$0xff]
        %v280 = vld [vmem:[%s184 + $0x1b8] sm:$0xff]
        %v281 = vld [vmem:[%s184 + $0x1c0] sm:$0xff]
        %v282 = vld [vmem:[%s184 + $0x1c8] sm:$0xff]
        %v283 = vld [vmem:[%s184 + $0x1d0] sm:$0xff]
        %v284 = vld [vmem:[%s184 + $0x1d8] sm:$0xff]
        %v285 = vld [vmem:[%s184 + $0x1e0] sm:$0xff]
        %v286 = vld [vmem:[%s184 + $0x1e8] sm:$0xff]
        %v287 = vld [vmem:[%s184 + $0x1f0] sm:$0xff]
        %v288 = vld [vmem:[%s184 + $0x1f8] sm:$0xff]
        %v289 = vld [vmem:[%s184 + $0x200] sm:$0xff]
        %v290 = vld [vmem:[%s184 + $0x208] sm:$0xff]
        %v291 = vld [vmem:[%s184 + $0x210] sm:$0xff]
        %v292 = vld [vmem:[%s184 + $0x218] sm:$0xff]
        %v293 = vld [vmem:[%s184 + $0x220] sm:$0xff]
        %v294 = vld [vmem:[%s184 + $0x228] sm:$0xff]
        %v295 = vld [vmem:[%s184 + $0x230] sm:$0xff]
        %v296 = vld [vmem:[%s184 + $0x238] sm:$0xff]
        %v297 = vld [vmem:[%s184 + $0x240] sm:$0xff]
        %v298 = vld [vmem:[%s184 + $0x248] sm:$0xff]
        %v299 = vld [vmem:[%s184 + $0x250] sm:$0xff]
        %v300 = vld [vmem:[%s184 + $0x258] sm:$0xff]
        %v301 = vld [vmem:[%s184 + $0x260] sm:$0xff]
        %v302 = vld [vmem:[%s184 + $0x268] sm:$0xff]
        %v303 = vld [vmem:[%s184 + $0x270] sm:$0xff]
        %v304 = vld [vmem:[%s184 + $0x278] sm:$0xff]
        %v305 = vld [vmem:[%s184 + $0x280] sm:$0xff]
        %v306 = vld [vmem:[%s184 + $0x288] sm:$0xff]
        %v307 = vld [vmem:[%s184 + $0x290] sm:$0xff]
        %v308 = vld [vmem:[%s184 + $0x298] sm:$0xff]
        %v309 = vld [vmem:[%s184 + $0x2a0] sm:$0xff]
        %v310 = vld [vmem:[%s184 + $0x2a8] sm:$0xff]
        %v311 = vld [vmem:[%s184 + $0x2b0] sm:$0xff]
        %v312 = vld [vmem:[%s184 + $0x2b8] sm:$0xff]
        %v313 = vld [vmem:[%s184 + $0x2c0] sm:$0xff]
        %v314 = vld [vmem:[%s184 + $0x2c8] sm:$0xff]
        %v315 = vld [vmem:[%s184 + $0x2d0] sm:$0xff]
        %v316 = vld [vmem:[%s184 + $0x2d8] sm:$0xff]
        %v317 = vld [vmem:[%s184 + $0x2e0] sm:$0xff]
        %v318 = vld [vmem:[%s184 + $0x2e8] sm:$0xff]
        %v319 = vld [vmem:[%s184 + $0x2f0] sm:$0xff]
        %v320 = vld [vmem:[%s184 + $0x2f8] sm:$0xff]
        %v321 = vld [vmem:[%s184 + $0x300] sm:$0xff]
        %v322 = vld [vmem:[%s184 + $0x308] sm:$0xff]
        %v323 = vld [vmem:[%s184 + $0x310] sm:$0xff]
        %v324 = vld [vmem:[%s184 + $0x318] sm:$0xff]
        %v325 = vld [vmem:[%s184 + $0x320] sm:$0xff]
        %v326 = vld [vmem:[%s184 + $0x328] sm:$0xff]
        %v327 = vld [vmem:[%s184 + $0x330] sm:$0xff]
        %v328 = vld [vmem:[%s184 + $0x338] sm:$0xff]
        %v329 = vld [vmem:[%s184 + $0x340] sm:$0xff]
        %v330 = vld [vmem:[%s184 + $0x348] sm:$0xff]
        %v331 = vld [vmem:[%s184 + $0x350] sm:$0xff]
        %v332 = vld [vmem:[%s184 + $0x358] sm:$0xff]
        %v333 = vld [vmem:[%s184 + $0x360] sm:$0xff]
        %v334 = vld [vmem:[%s184 + $0x368] sm:$0xff]
        %v335 = vld [vmem:[%s184 + $0x370] sm:$0xff]
        %v336 = vld [vmem:[%s184 + $0x378] sm:$0xff]
        %v337 = vld [vmem:[%s184 + $0x380] sm:$0xff]
        %v338 = vld [vmem:[%s184 + $0x388] sm:$0xff]
        %v339 = vld [vmem:[%s184 + $0x390] sm:$0xff]
        %v340 = vld [vmem:[%s184 + $0x398] sm:$0xff]
        %v341 = vld [vmem:[%s184 + $0x3a0] sm:$0xff]
        %v342 = vld [vmem:[%s184 + $0x3a8] sm:$0xff]
        %v343 = vld [vmem:[%s184 + $0x3b0] sm:$0xff]
        %v344 = vld [vmem:[%s184 + $0x3b8] sm:$0xff]
        %v345 = vld [vmem:[%s184 + $0x3c0] sm:$0xff]
        %v346 = vld [vmem:[%s184 + $0x3c8] sm:$0xff]
        %v347 = vld [vmem:[%s184 + $0x3d0] sm:$0xff]
        %v348 = vld [vmem:[%s184 + $0x3d8] sm:$0xff]
        %v349 = vld [vmem:[%s184 + $0x3e0] sm:$0xff]
        %v350 = vld [vmem:[%s184 + $0x3e8] sm:$0xff]
        %v351 = vld [vmem:[%s184 + $0x3f0] sm:$0xff]
        %v352 = vld [vmem:[%s184 + $0x3f8] sm:$0xff]
        %v353 = vld [vmem:[%s184 + $0x400] sm:$0xff]
        %v354 = vld [vmem:[%s184 + $0x408] sm:$0xff]
        %v355 = vld [vmem:[%s184 + $0x410] sm:$0xff]
        %v356 = vld [vmem:[%s184 + $0x418] sm:$0xff]
        %v357 = vld [vmem:[%s184 + $0x420] sm:$0xff]
        %v358 = vld [vmem:[%s184 + $0x428] sm:$0xff]
        %v359 = vld [vmem:[%s184 + $0x430] sm:$0xff]
        %v360 = vld [vmem:[%s184 + $0x438] sm:$0xff]
        %v361 = vld [vmem:[%s184 + $0x440] sm:$0xff]
        %v362 = vld [vmem:[%s184 + $0x448] sm:$0xff]
        %v363 = vld [vmem:[%s184 + $0x450] sm:$0xff]
        %v364 = vld [vmem:[%s184 + $0x458] sm:$0xff]
        %v365 = vld [vmem:[%s184 + $0x460] sm:$0xff]
        %v366 = vld [vmem:[%s184 + $0x468] sm:$0xff]
        %v367 = vld [vmem:[%s184 + $0x470] sm:$0xff]
        %v368 = vld [vmem:[%s184 + $0x478] sm:$0xff]
        %v369 = vld [vmem:[%s184 + $0x480] sm:$0xff]
        %v370 = vld [vmem:[%s184 + $0x488] sm:$0xff]
        %v371 = vld [vmem:[%s184 + $0x490] sm:$0xff]
        %v372 = vld [vmem:[%s184 + $0x498] sm:$0xff]
        %v373 = vld [vmem:[%s184 + $0x4a0] sm:$0xff]
        %v374 = vld [vmem:[%s184 + $0x4a8] sm:$0xff]
        %v375 = vld [vmem:[%s184 + $0x4b0] sm:$0xff]
        %v376 = vld [vmem:[%s184 + $0x4b8] sm:$0xff]
        %v377 = vld [vmem:[%s184 + $0x4c0] sm:$0xff]
        %v378 = vld [vmem:[%s184 + $0x4c8] sm:$0xff]
        %v379 = vld [vmem:[%s184 + $0x4d0] sm:$0xff]
        %v380 = vld [vmem:[%s184 + $0x4d8] sm:$0xff]
        %v381 = vld [vmem:[%s184 + $0x4e0] sm:$0xff]
        %v382 = vld [vmem:[%s184 + $0x4e8] sm:$0xff]
        %v383 = vld [vmem:[%s184 + $0x4f0] sm:$0xff]
        %v384 = vld [vmem:[%s184 + $0x4f8] sm:$0xff]
        %v385 = vld [vmem:[%s184 + $0x500] sm:$0xff]
        %v386 = vld [vmem:[%s184 + $0x508] sm:$0xff]
        %v387 = vld [vmem:[%s184 + $0x510] sm:$0xff]
        %v388 = vld [vmem:[%s184 + $0x518] sm:$0xff]
        %v389 = vld [vmem:[%s184 + $0x520] sm:$0xff]
        %v390 = vld [vmem:[%s184 + $0x528] sm:$0xff]
        %v391 = vld [vmem:[%s184 + $0x530] sm:$0xff]
        %v392 = vld [vmem:[%s184 + $0x538] sm:$0xff]
        %v393 = vld [vmem:[%s184 + $0x540] sm:$0xff]
        %v394 = vld [vmem:[%s184 + $0x548] sm:$0xff]
        %v395 = vld [vmem:[%s184 + $0x550] sm:$0xff]
        %v396 = vld [vmem:[%s184 + $0x558] sm:$0xff]
        %v397 = vld [vmem:[%s184 + $0x560] sm:$0xff]
        %v398 = vld [vmem:[%s184 + $0x568] sm:$0xff]
        %v399 = vld [vmem:[%s184 + $0x570] sm:$0xff]
        %v400 = vld [vmem:[%s184 + $0x578] sm:$0xff]
        %v401 = vld [vmem:[%s184 + $0x580] sm:$0xff]
        %v402 = vld [vmem:[%s184 + $0x588] sm:$0xff]
        %v403 = vld [vmem:[%s184 + $0x590] sm:$0xff]
        %v404 = vld [vmem:[%s184 + $0x598] sm:$0xff]
        %v405 = vld [vmem:[%s184 + $0x5a0] sm:$0xff]
        %v406 = vld [vmem:[%s184 + $0x5a8] sm:$0xff]
        %v407 = vld [vmem:[%s184 + $0x5b0] sm:$0xff]
        %v408 = vld [vmem:[%s184 + $0x5b8] sm:$0xff]
        %v409 = vld [vmem:[%s184 + $0x5c0] sm:$0xff]
        %v410 = vld [vmem:[%s184 + $0x5c8] sm:$0xff]
        %v411 = vld [vmem:[%s184 + $0x5d0] sm:$0xff]
        %v412 = vld [vmem:[%s184 + $0x5d8] sm:$0xff]
        %v413 = vld [vmem:[%s184 + $0x5e0] sm:$0xff]
        %v414 = vld [vmem:[%s184 + $0x5e8] sm:$0xff]
        %v415 = vld [vmem:[%s184 + $0x5f0] sm:$0xff]
        %v416 = vld [vmem:[%s184 + $0x5f8] sm:$0xff]
        %v417 = vld [vmem:[%s184 + $0x600] sm:$0xff]
        %v418 = vld [vmem:[%s184 + $0x608] sm:$0xff]
        %v419 = vld [vmem:[%s184 + $0x610] sm:$0xff]
        %v420 = vld [vmem:[%s184 + $0x618] sm:$0xff]
        %v421 = vld [vmem:[%s184 + $0x620] sm:$0xff]
        %v422 = vld [vmem:[%s184 + $0x628] sm:$0xff]
        %v423 = vld [vmem:[%s184 + $0x630] sm:$0xff]
        %v424 = vld [vmem:[%s184 + $0x638] sm:$0xff]
        %v425 = vld [vmem:[%s184 + $0x640] sm:$0xff]
        %v426 = vld [vmem:[%s184 + $0x648] sm:$0xff]
        %v427 = vld [vmem:[%s184 + $0x650] sm:$0xff]
        %v428 = vld [vmem:[%s184 + $0x658] sm:$0xff]
        %v429 = vld [vmem:[%s184 + $0x660] sm:$0xff]
        %v430 = vld [vmem:[%s184 + $0x668] sm:$0xff]
        %v431 = vld [vmem:[%s184 + $0x670] sm:$0xff]
        %v432 = vld [vmem:[%s184 + $0x678] sm:$0xff]
        %v433 = vld [vmem:[%s184 + $0x680] sm:$0xff]
        %v434 = vld [vmem:[%s184 + $0x688] sm:$0xff]
        %v435 = vld [vmem:[%s184 + $0x690] sm:$0xff]
        %v436 = vld [vmem:[%s184 + $0x698] sm:$0xff]
        %v437 = vld [vmem:[%s184 + $0x6a0] sm:$0xff]
        %v438 = vld [vmem:[%s184 + $0x6a8] sm:$0xff]
        %v439 = vld [vmem:[%s184 + $0x6b0] sm:$0xff]
        %v440 = vld [vmem:[%s184 + $0x6b8] sm:$0xff]
        %v441 = vld [vmem:[%s184 + $0x6c0] sm:$0xff]
        %v442 = vld [vmem:[%s184 + $0x6c8] sm:$0xff]
        %v443 = vld [vmem:[%s184 + $0x6d0] sm:$0xff]
        %v444 = vld [vmem:[%s184 + $0x6d8] sm:$0xff]
        %v445 = vld [vmem:[%s184 + $0x6e0] sm:$0xff]
        %v446 = vld [vmem:[%s184 + $0x6e8] sm:$0xff]
        %v447 = vld [vmem:[%s184 + $0x6f0] sm:$0xff]
        %v448 = vld [vmem:[%s184 + $0x6f8] sm:$0xff]
        %v449 = vld [vmem:[%s184 + $0x700] sm:$0xff]
        %v450 = vld [vmem:[%s184 + $0x708] sm:$0xff]
        %v451 = vld [vmem:[%s184 + $0x710] sm:$0xff]
        %v452 = vld [vmem:[%s184 + $0x718] sm:$0xff]
        %v453 = vld [vmem:[%s184 + $0x720] sm:$0xff]
        %v454 = vld [vmem:[%s184 + $0x728] sm:$0xff]
        %v455 = vld [vmem:[%s184 + $0x730] sm:$0xff]
        %v456 = vld [vmem:[%s184 + $0x738] sm:$0xff]
        %v457 = vld [vmem:[%s184 + $0x740] sm:$0xff]
        %v458 = vld [vmem:[%s184 + $0x748] sm:$0xff]
        %v459 = vld [vmem:[%s184 + $0x750] sm:$0xff]
        %v460 = vld [vmem:[%s184 + $0x758] sm:$0xff]
        %v461 = vld [vmem:[%s184 + $0x760] sm:$0xff]
        %v462 = vld [vmem:[%s184 + $0x768] sm:$0xff]
        %v463 = vld [vmem:[%s184 + $0x770] sm:$0xff]
        %v464 = vld [vmem:[%s184 + $0x778] sm:$0xff]
        %v465 = vld [vmem:[%s184 + $0x780] sm:$0xff]
        %v466 = vld [vmem:[%s184 + $0x788] sm:$0xff]
        %v467 = vld [vmem:[%s184 + $0x790] sm:$0xff]
        %v468 = vld [vmem:[%s184 + $0x798] sm:$0xff]
        %v469 = vld [vmem:[%s184 + $0x7a0] sm:$0xff]
        %v470 = vld [vmem:[%s184 + $0x7a8] sm:$0xff]
        %v471 = vld [vmem:[%s184 + $0x7b0] sm:$0xff]
        %v472 = vld [vmem:[%s184 + $0x7b8] sm:$0xff]
        %v473 = vld [vmem:[%s184 + $0x7c0] sm:$0xff]
        %v474 = vld [vmem:[%s184 + $0x7c8] sm:$0xff]
        %v475 = vld [vmem:[%s184 + $0x7d0] sm:$0xff]
        %v476 = vld [vmem:[%s184 + $0x7d8] sm:$0xff]
        %v477 = vld [vmem:[%s184 + $0x7e0] sm:$0xff]
        %v478 = vld [vmem:[%s184 + $0x7e8] sm:$0xff]
        %v479 = vld [vmem:[%s184 + $0x7f0] sm:$0xff]
        %v480 = vld [vmem:[%s184 + $0x7f8] sm:$0xff]
        %v481 = vld [vmem:[#allocation4] sm:$0xff]
        %v482 = vld [vmem:[#allocation6] sm:$0x1]
        %v484 = vperm.slane %v482, 0
        %487 = vst [vmem:[#allocation1] ss:$4 sm:$0xff] %v481
        %v488 = vld.sshfl [vmem:[#allocation1] sm:$0xff pattern:$0x73625140]
        %v489 = vld.sshfl [vmem:[#allocation1 + $0x8] sm:$0xff pattern:$0x73625140]
        %v490 = vld.sshfl [vmem:[#allocation1 + $0x10] sm:$0xff pattern:$0x73625140]
        %v491 = vld.sshfl [vmem:[#allocation1 + $0x18] sm:$0xff pattern:$0x73625140]
        %496 = vmatpush.xpose.msra.mxu0 0.0
        %497 = vmatpush.xpose.msra.mxu0 0.0
        %498 = vmatpush.xpose.msra.mxu0 0.0
        %499 = vmatpush.xpose.msra.mxu0 0.0
        %500 = vmatpush.xpose.msra.mxu0 0.0
        %501 = vmatpush.xpose.msra.mxu0 0.0
        %502 = vmatpush.xpose.msra.mxu0 0.0
        %503 = vmatpush.xpose.msra.mxu0 0.0
        %504 = vmatpush.xpose.msra.mxu0 0.0
        %505 = vmatpush.xpose.msra.mxu0 0.0
        %506 = vmatpush.xpose.msra.mxu0 0.0
        %507 = vmatpush.xpose.msra.mxu0 0.0
        %508 = vmatpush.xpose.msra.mxu0 0.0
        %509 = vmatpush.xpose.msra.mxu0 0.0
        %510 = vmatpush.xpose.msra.mxu0 0.0
        %511 = vmatpush.xpose.msra.mxu0 %v488
        %512 = vmatmul.f32.gmra.mxu0 %v225
        %v513 = vpop.f32.mrf.mxu0
        %v514 = vadd.f32 %v484, %v513
        %515 = vmatmul.f32.gmra.mxu0 %v229
        %v516 = vpop.f32.mrf.mxu0
        %v517 = vadd.f32 %v484, %v516
        %518 = vmatmul.f32.gmra.mxu0 %v233
        %v519 = vpop.f32.mrf.mxu0
        %v520 = vadd.f32 %v484, %v519
        %521 = vmatmul.f32.gmra.mxu0 %v237
        %v522 = vpop.f32.mrf.mxu0
        %v523 = vadd.f32 %v484, %v522
        %524 = vmatmul.f32.gmra.mxu0 %v241
        %v525 = vpop.f32.mrf.mxu0
        %v526 = vadd.f32 %v484, %v525
        %527 = vmatmul.f32.gmra.mxu0 %v245
        %v528 = vpop.f32.mrf.mxu0
        %v529 = vadd.f32 %v484, %v528
        %530 = vmatmul.f32.gmra.mxu0 %v249
        %v531 = vpop.f32.mrf.mxu0
        %v532 = vadd.f32 %v484, %v531
        %533 = vmatmul.f32.gmra.mxu0 %v253
        %v534 = vpop.f32.mrf.mxu0
        %v535 = vadd.f32 %v484, %v534
        %536 = vmatmul.f32.gmra.mxu0 %v257
        %v537 = vpop.f32.mrf.mxu0
        %v538 = vadd.f32 %v484, %v537
        %539 = vmatmul.f32.gmra.mxu0 %v261
        %v540 = vpop.f32.mrf.mxu0
        %v541 = vadd.f32 %v484, %v540
        %542 = vmatmul.f32.gmra.mxu0 %v265
        %v543 = vpop.f32.mrf.mxu0
        %v544 = vadd.f32 %v484, %v543
        %545 = vmatmul.f32.gmra.mxu0 %v269
        %v546 = vpop.f32.mrf.mxu0
        %v547 = vadd.f32 %v484, %v546
        %548 = vmatmul.f32.gmra.mxu0 %v273
        %v549 = vpop.f32.mrf.mxu0
        %v550 = vadd.f32 %v484, %v549
        %551 = vmatmul.f32.gmra.mxu0 %v277
        %v552 = vpop.f32.mrf.mxu0
        %v553 = vadd.f32 %v484, %v552
        %554 = vmatmul.f32.gmra.mxu0 %v281
        %v555 = vpop.f32.mrf.mxu0
        %v556 = vadd.f32 %v484, %v555
        %557 = vmatmul.f32.gmra.mxu0 %v285
        %v558 = vpop.f32.mrf.mxu0
        %v559 = vadd.f32 %v484, %v558
        %560 = vmatmul.f32.gmra.mxu0 %v289
        %v561 = vpop.f32.mrf.mxu0
        %v562 = vadd.f32 %v484, %v561
        %563 = vmatmul.f32.gmra.mxu0 %v293
        %v564 = vpop.f32.mrf.mxu0
        %v565 = vadd.f32 %v484, %v564
        %566 = vmatmul.f32.gmra.mxu0 %v297
        %v567 = vpop.f32.mrf.mxu0
        %v568 = vadd.f32 %v484, %v567
        %569 = vmatmul.f32.gmra.mxu0 %v301
        %v570 = vpop.f32.mrf.mxu0
        %v571 = vadd.f32 %v484, %v570
        %572 = vmatmul.f32.gmra.mxu0 %v305
        %v573 = vpop.f32.mrf.mxu0
        %v574 = vadd.f32 %v484, %v573
        %575 = vmatmul.f32.gmra.mxu0 %v309
        %v576 = vpop.f32.mrf.mxu0
        %v577 = vadd.f32 %v484, %v576
        %578 = vmatmul.f32.gmra.mxu0 %v313
        %v579 = vpop.f32.mrf.mxu0
        %v580 = vadd.f32 %v484, %v579
        %581 = vmatmul.f32.gmra.mxu0 %v317
        %v582 = vpop.f32.mrf.mxu0
        %v583 = vadd.f32 %v484, %v582
        %584 = vmatmul.f32.gmra.mxu0 %v321
        %v585 = vpop.f32.mrf.mxu0
        %v586 = vadd.f32 %v484, %v585
        %587 = vmatmul.f32.gmra.mxu0 %v325
        %v588 = vpop.f32.mrf.mxu0
        %v589 = vadd.f32 %v484, %v588
        %590 = vmatmul.f32.gmra.mxu0 %v329
        %v591 = vpop.f32.mrf.mxu0
        %v592 = vadd.f32 %v484, %v591
        %593 = vmatmul.f32.gmra.mxu0 %v333
        %v594 = vpop.f32.mrf.mxu0
        %v595 = vadd.f32 %v484, %v594
        %596 = vmatmul.f32.gmra.mxu0 %v337
        %v597 = vpop.f32.mrf.mxu0
        %v598 = vadd.f32 %v484, %v597
        %599 = vmatmul.f32.gmra.mxu0 %v341
        %v600 = vpop.f32.mrf.mxu0
        %v601 = vadd.f32 %v484, %v600
        %602 = vmatmul.f32.gmra.mxu0 %v345
        %v603 = vpop.f32.mrf.mxu0
        %v604 = vadd.f32 %v484, %v603
        %605 = vmatmul.f32.gmra.mxu0 %v349
        %v606 = vpop.f32.mrf.mxu0
        %v607 = vadd.f32 %v484, %v606
        %608 = vmatmul.f32.gmra.mxu0 %v353
        %v609 = vpop.f32.mrf.mxu0
        %v610 = vadd.f32 %v484, %v609
        %611 = vmatmul.f32.gmra.mxu0 %v357
        %v612 = vpop.f32.mrf.mxu0
        %v613 = vadd.f32 %v484, %v612
        %614 = vmatmul.f32.gmra.mxu0 %v361
        %v615 = vpop.f32.mrf.mxu0
        %v616 = vadd.f32 %v484, %v615
        %617 = vmatmul.f32.gmra.mxu0 %v365
        %v618 = vpop.f32.mrf.mxu0
        %v619 = vadd.f32 %v484, %v618
        %620 = vmatmul.f32.gmra.mxu0 %v369
        %v621 = vpop.f32.mrf.mxu0
        %v622 = vadd.f32 %v484, %v621
        %623 = vmatmul.f32.gmra.mxu0 %v373
        %v624 = vpop.f32.mrf.mxu0
        %v625 = vadd.f32 %v484, %v624
        %626 = vmatmul.f32.gmra.mxu0 %v377
        %v627 = vpop.f32.mrf.mxu0
        %v628 = vadd.f32 %v484, %v627
        %629 = vmatmul.f32.gmra.mxu0 %v381
        %v630 = vpop.f32.mrf.mxu0
        %v631 = vadd.f32 %v484, %v630
        %632 = vmatmul.f32.gmra.mxu0 %v385
        %v633 = vpop.f32.mrf.mxu0
        %v634 = vadd.f32 %v484, %v633
        %635 = vmatmul.f32.gmra.mxu0 %v389
        %v636 = vpop.f32.mrf.mxu0
        %v637 = vadd.f32 %v484, %v636
        %638 = vmatmul.f32.gmra.mxu0 %v393
        %v639 = vpop.f32.mrf.mxu0
        %v640 = vadd.f32 %v484, %v639
        %641 = vmatmul.f32.gmra.mxu0 %v397
        %v642 = vpop.f32.mrf.mxu0
        %v643 = vadd.f32 %v484, %v642
        %644 = vmatmul.f32.gmra.mxu0 %v401
        %v645 = vpop.f32.mrf.mxu0
        %v646 = vadd.f32 %v484, %v645
        %647 = vmatmul.f32.gmra.mxu0 %v405
        %v648 = vpop.f32.mrf.mxu0
        %v649 = vadd.f32 %v484, %v648
        %650 = vmatmul.f32.gmra.mxu0 %v409
        %v651 = vpop.f32.mrf.mxu0
        %v652 = vadd.f32 %v484, %v651
        %653 = vmatmul.f32.gmra.mxu0 %v413
        %v654 = vpop.f32.mrf.mxu0
        %v655 = vadd.f32 %v484, %v654
        %656 = vmatmul.f32.gmra.mxu0 %v417
        %v657 = vpop.f32.mrf.mxu0
        %v658 = vadd.f32 %v484, %v657
        %659 = vmatmul.f32.gmra.mxu0 %v421
        %v660 = vpop.f32.mrf.mxu0
        %v661 = vadd.f32 %v484, %v660
        %662 = vmatmul.f32.gmra.mxu0 %v425
        %v663 = vpop.f32.mrf.mxu0
        %v664 = vadd.f32 %v484, %v663
        %665 = vmatmul.f32.gmra.mxu0 %v429
        %v666 = vpop.f32.mrf.mxu0
        %v667 = vadd.f32 %v484, %v666
        %668 = vmatmul.f32.gmra.mxu0 %v433
        %v669 = vpop.f32.mrf.mxu0
        %v670 = vadd.f32 %v484, %v669
        %671 = vmatmul.f32.gmra.mxu0 %v437
        %v672 = vpop.f32.mrf.mxu0
        %v673 = vadd.f32 %v484, %v672
        %674 = vmatmul.f32.gmra.mxu0 %v441
        %v675 = vpop.f32.mrf.mxu0
        %v676 = vadd.f32 %v484, %v675
        %677 = vmatmul.f32.gmra.mxu0 %v445
        %v678 = vpop.f32.mrf.mxu0
        %v679 = vadd.f32 %v484, %v678
        %680 = vmatmul.f32.gmra.mxu0 %v449
        %v681 = vpop.f32.mrf.mxu0
        %v682 = vadd.f32 %v484, %v681
        %683 = vmatmul.f32.gmra.mxu0 %v453
        %v684 = vpop.f32.mrf.mxu0
        %v685 = vadd.f32 %v484, %v684
        %686 = vmatmul.f32.gmra.mxu0 %v457
        %v687 = vpop.f32.mrf.mxu0
        %v688 = vadd.f32 %v484, %v687
        %689 = vmatmul.f32.gmra.mxu0 %v461
        %v690 = vpop.f32.mrf.mxu0
        %v691 = vadd.f32 %v484, %v690
        %692 = vmatmul.f32.gmra.mxu0 %v465
        %v693 = vpop.f32.mrf.mxu0
        %v694 = vadd.f32 %v484, %v693
        %695 = vmatmul.f32.gmra.mxu0 %v469
        %v696 = vpop.f32.mrf.mxu0
        %v697 = vadd.f32 %v484, %v696
        %698 = vmatmul.f32.gmra.mxu0 %v473
        %v699 = vpop.f32.mrf.mxu0
        %v700 = vadd.f32 %v484, %v699
        %701 = vmatmul.f32.gmra.mxu0 %v477
        %v702 = vpop.f32.mrf.mxu0
        %v703 = vadd.f32 %v484, %v702
        %704 = vdwg.mxu0
        %705 = vmatpush.xpose.msra.mxu0 0.0
        %706 = vmatpush.xpose.msra.mxu0 0.0
        %707 = vmatpush.xpose.msra.mxu0 0.0
        %708 = vmatpush.xpose.msra.mxu0 0.0
        %709 = vmatpush.xpose.msra.mxu0 0.0
        %710 = vmatpush.xpose.msra.mxu0 0.0
        %711 = vmatpush.xpose.msra.mxu0 0.0
        %712 = vmatpush.xpose.msra.mxu0 0.0
        %713 = vmatpush.xpose.msra.mxu0 0.0
        %714 = vmatpush.xpose.msra.mxu0 0.0
        %715 = vmatpush.xpose.msra.mxu0 0.0
        %716 = vmatpush.xpose.msra.mxu0 0.0
        %717 = vmatpush.xpose.msra.mxu0 0.0
        %718 = vmatpush.xpose.msra.mxu0 0.0
        %719 = vmatpush.xpose.msra.mxu0 0.0
        %720 = vmatpush.xpose.msra.mxu0 %v489
        %721 = vmatmul.f32.gmra.mxu0 %v226
        %v722 = vpop.f32.mrf.mxu0
        %v723 = vadd.f32 %v514, %v722
        %724 = vmatmul.f32.gmra.mxu0 %v230
        %v725 = vpop.f32.mrf.mxu0
        %v726 = vadd.f32 %v517, %v725
        %727 = vmatmul.f32.gmra.mxu0 %v234
        %v728 = vpop.f32.mrf.mxu0
        %v729 = vadd.f32 %v520, %v728
        %730 = vmatmul.f32.gmra.mxu0 %v238
        %v731 = vpop.f32.mrf.mxu0
        %v732 = vadd.f32 %v523, %v731
        %733 = vmatmul.f32.gmra.mxu0 %v242
        %v734 = vpop.f32.mrf.mxu0
        %v735 = vadd.f32 %v526, %v734
        %736 = vmatmul.f32.gmra.mxu0 %v246
        %v737 = vpop.f32.mrf.mxu0
        %v738 = vadd.f32 %v529, %v737
        %739 = vmatmul.f32.gmra.mxu0 %v250
        %v740 = vpop.f32.mrf.mxu0
        %v741 = vadd.f32 %v532, %v740
        %742 = vmatmul.f32.gmra.mxu0 %v254
        %v743 = vpop.f32.mrf.mxu0
        %v744 = vadd.f32 %v535, %v743
        %745 = vmatmul.f32.gmra.mxu0 %v258
        %v746 = vpop.f32.mrf.mxu0
        %v747 = vadd.f32 %v538, %v746
        %748 = vmatmul.f32.gmra.mxu0 %v262
        %v749 = vpop.f32.mrf.mxu0
        %v750 = vadd.f32 %v541, %v749
        %751 = vmatmul.f32.gmra.mxu0 %v266
        %v752 = vpop.f32.mrf.mxu0
        %v753 = vadd.f32 %v544, %v752
        %754 = vmatmul.f32.gmra.mxu0 %v270
        %v755 = vpop.f32.mrf.mxu0
        %v756 = vadd.f32 %v547, %v755
        %757 = vmatmul.f32.gmra.mxu0 %v274
        %v758 = vpop.f32.mrf.mxu0
        %v759 = vadd.f32 %v550, %v758
        %760 = vmatmul.f32.gmra.mxu0 %v278
        %v761 = vpop.f32.mrf.mxu0
        %v762 = vadd.f32 %v553, %v761
        %763 = vmatmul.f32.gmra.mxu0 %v282
        %v764 = vpop.f32.mrf.mxu0
        %v765 = vadd.f32 %v556, %v764
        %766 = vmatmul.f32.gmra.mxu0 %v286
        %v767 = vpop.f32.mrf.mxu0
        %v768 = vadd.f32 %v559, %v767
        %769 = vmatmul.f32.gmra.mxu0 %v290
        %v770 = vpop.f32.mrf.mxu0
        %v771 = vadd.f32 %v562, %v770
        %772 = vmatmul.f32.gmra.mxu0 %v294
        %v773 = vpop.f32.mrf.mxu0
        %v774 = vadd.f32 %v565, %v773
        %775 = vmatmul.f32.gmra.mxu0 %v298
        %v776 = vpop.f32.mrf.mxu0
        %v777 = vadd.f32 %v568, %v776
        %778 = vmatmul.f32.gmra.mxu0 %v302
        %v779 = vpop.f32.mrf.mxu0
        %v780 = vadd.f32 %v571, %v779
        %781 = vmatmul.f32.gmra.mxu0 %v306
        %v782 = vpop.f32.mrf.mxu0
        %v783 = vadd.f32 %v574, %v782
        %784 = vmatmul.f32.gmra.mxu0 %v310
        %v785 = vpop.f32.mrf.mxu0
        %v786 = vadd.f32 %v577, %v785
        %787 = vmatmul.f32.gmra.mxu0 %v314
        %v788 = vpop.f32.mrf.mxu0
        %v789 = vadd.f32 %v580, %v788
        %790 = vmatmul.f32.gmra.mxu0 %v318
        %v791 = vpop.f32.mrf.mxu0
        %v792 = vadd.f32 %v583, %v791
        %793 = vmatmul.f32.gmra.mxu0 %v322
        %v794 = vpop.f32.mrf.mxu0
        %v795 = vadd.f32 %v586, %v794
        %796 = vmatmul.f32.gmra.mxu0 %v326
        %v797 = vpop.f32.mrf.mxu0
        %v798 = vadd.f32 %v589, %v797
        %799 = vmatmul.f32.gmra.mxu0 %v330
        %v800 = vpop.f32.mrf.mxu0
        %v801 = vadd.f32 %v592, %v800
        %802 = vmatmul.f32.gmra.mxu0 %v334
        %v803 = vpop.f32.mrf.mxu0
        %v804 = vadd.f32 %v595, %v803
        %805 = vmatmul.f32.gmra.mxu0 %v338
        %v806 = vpop.f32.mrf.mxu0
        %v807 = vadd.f32 %v598, %v806
        %808 = vmatmul.f32.gmra.mxu0 %v342
        %v809 = vpop.f32.mrf.mxu0
        %v810 = vadd.f32 %v601, %v809
        %811 = vmatmul.f32.gmra.mxu0 %v346
        %v812 = vpop.f32.mrf.mxu0
        %v813 = vadd.f32 %v604, %v812
        %814 = vmatmul.f32.gmra.mxu0 %v350
        %v815 = vpop.f32.mrf.mxu0
        %v816 = vadd.f32 %v607, %v815
        %817 = vmatmul.f32.gmra.mxu0 %v354
        %v818 = vpop.f32.mrf.mxu0
        %v819 = vadd.f32 %v610, %v818
        %820 = vmatmul.f32.gmra.mxu0 %v358
        %v821 = vpop.f32.mrf.mxu0
        %v822 = vadd.f32 %v613, %v821
        %823 = vmatmul.f32.gmra.mxu0 %v362
        %v824 = vpop.f32.mrf.mxu0
        %v825 = vadd.f32 %v616, %v824
        %826 = vmatmul.f32.gmra.mxu0 %v366
        %v827 = vpop.f32.mrf.mxu0
        %v828 = vadd.f32 %v619, %v827
        %829 = vmatmul.f32.gmra.mxu0 %v370
        %v830 = vpop.f32.mrf.mxu0
        %v831 = vadd.f32 %v622, %v830
        %832 = vmatmul.f32.gmra.mxu0 %v374
        %v833 = vpop.f32.mrf.mxu0
        %v834 = vadd.f32 %v625, %v833
        %835 = vmatmul.f32.gmra.mxu0 %v378
        %v836 = vpop.f32.mrf.mxu0
        %v837 = vadd.f32 %v628, %v836
        %838 = vmatmul.f32.gmra.mxu0 %v382
        %v839 = vpop.f32.mrf.mxu0
        %v840 = vadd.f32 %v631, %v839
        %841 = vmatmul.f32.gmra.mxu0 %v386
        %v842 = vpop.f32.mrf.mxu0
        %v843 = vadd.f32 %v634, %v842
        %844 = vmatmul.f32.gmra.mxu0 %v390
        %v845 = vpop.f32.mrf.mxu0
        %v846 = vadd.f32 %v637, %v845
        %847 = vmatmul.f32.gmra.mxu0 %v394
        %v848 = vpop.f32.mrf.mxu0
        %v849 = vadd.f32 %v640, %v848
        %850 = vmatmul.f32.gmra.mxu0 %v398
        %v851 = vpop.f32.mrf.mxu0
        %v852 = vadd.f32 %v643, %v851
        %853 = vmatmul.f32.gmra.mxu0 %v402
        %v854 = vpop.f32.mrf.mxu0
        %v855 = vadd.f32 %v646, %v854
        %856 = vmatmul.f32.gmra.mxu0 %v406
        %v857 = vpop.f32.mrf.mxu0
        %v858 = vadd.f32 %v649, %v857
        %859 = vmatmul.f32.gmra.mxu0 %v410
        %v860 = vpop.f32.mrf.mxu0
        %v861 = vadd.f32 %v652, %v860
        %862 = vmatmul.f32.gmra.mxu0 %v414
        %v863 = vpop.f32.mrf.mxu0
        %v864 = vadd.f32 %v655, %v863
        %865 = vmatmul.f32.gmra.mxu0 %v418
        %v866 = vpop.f32.mrf.mxu0
        %v867 = vadd.f32 %v658, %v866
        %868 = vmatmul.f32.gmra.mxu0 %v422
        %v869 = vpop.f32.mrf.mxu0
        %v870 = vadd.f32 %v661, %v869
        %871 = vmatmul.f32.gmra.mxu0 %v426
        %v872 = vpop.f32.mrf.mxu0
        %v873 = vadd.f32 %v664, %v872
        %874 = vmatmul.f32.gmra.mxu0 %v430
        %v875 = vpop.f32.mrf.mxu0
        %v876 = vadd.f32 %v667, %v875
        %877 = vmatmul.f32.gmra.mxu0 %v434
        %v878 = vpop.f32.mrf.mxu0
        %v879 = vadd.f32 %v670, %v878
        %880 = vmatmul.f32.gmra.mxu0 %v438
        %v881 = vpop.f32.mrf.mxu0
        %v882 = vadd.f32 %v673, %v881
        %883 = vmatmul.f32.gmra.mxu0 %v442
        %v884 = vpop.f32.mrf.mxu0
        %v885 = vadd.f32 %v676, %v884
        %886 = vmatmul.f32.gmra.mxu0 %v446
        %v887 = vpop.f32.mrf.mxu0
        %v888 = vadd.f32 %v679, %v887
        %889 = vmatmul.f32.gmra.mxu0 %v450
        %v890 = vpop.f32.mrf.mxu0
        %v891 = vadd.f32 %v682, %v890
        %892 = vmatmul.f32.gmra.mxu0 %v454
        %v893 = vpop.f32.mrf.mxu0
        %v894 = vadd.f32 %v685, %v893
        %895 = vmatmul.f32.gmra.mxu0 %v458
        %v896 = vpop.f32.mrf.mxu0
        %v897 = vadd.f32 %v688, %v896
        %898 = vmatmul.f32.gmra.mxu0 %v462
        %v899 = vpop.f32.mrf.mxu0
        %v900 = vadd.f32 %v691, %v899
        %901 = vmatmul.f32.gmra.mxu0 %v466
        %v902 = vpop.f32.mrf.mxu0
        %v903 = vadd.f32 %v694, %v902
        %904 = vmatmul.f32.gmra.mxu0 %v470
        %v905 = vpop.f32.mrf.mxu0
        %v906 = vadd.f32 %v697, %v905
        %907 = vmatmul.f32.gmra.mxu0 %v474
        %v908 = vpop.f32.mrf.mxu0
        %v909 = vadd.f32 %v700, %v908
        %910 = vmatmul.f32.gmra.mxu0 %v478
        %v911 = vpop.f32.mrf.mxu0
        %v912 = vadd.f32 %v703, %v911
        %913 = vdwg.mxu0
        %914 = vmatpush.xpose.msra.mxu0 0.0
        %915 = vmatpush.xpose.msra.mxu0 0.0
        %916 = vmatpush.xpose.msra.mxu0 0.0
        %917 = vmatpush.xpose.msra.mxu0 0.0
        %918 = vmatpush.xpose.msra.mxu0 0.0
        %919 = vmatpush.xpose.msra.mxu0 0.0
        %920 = vmatpush.xpose.msra.mxu0 0.0
        %921 = vmatpush.xpose.msra.mxu0 0.0
        %922 = vmatpush.xpose.msra.mxu0 0.0
        %923 = vmatpush.xpose.msra.mxu0 0.0
        %924 = vmatpush.xpose.msra.mxu0 0.0
        %925 = vmatpush.xpose.msra.mxu0 0.0
        %926 = vmatpush.xpose.msra.mxu0 0.0
        %927 = vmatpush.xpose.msra.mxu0 0.0
        %928 = vmatpush.xpose.msra.mxu0 0.0
        %929 = vmatpush.xpose.msra.mxu0 %v490
        %930 = vmatmul.f32.gmra.mxu0 %v227
        %v931 = vpop.f32.mrf.mxu0
        %v932 = vadd.f32 %v723, %v931
        %933 = vmatmul.f32.gmra.mxu0 %v231
        %v934 = vpop.f32.mrf.mxu0
        %v935 = vadd.f32 %v726, %v934
        %936 = vmatmul.f32.gmra.mxu0 %v235
        %v937 = vpop.f32.mrf.mxu0
        %v938 = vadd.f32 %v729, %v937
        %939 = vmatmul.f32.gmra.mxu0 %v239
        %v940 = vpop.f32.mrf.mxu0
        %v941 = vadd.f32 %v732, %v940
        %942 = vmatmul.f32.gmra.mxu0 %v243
        %v943 = vpop.f32.mrf.mxu0
        %v944 = vadd.f32 %v735, %v943
        %945 = vmatmul.f32.gmra.mxu0 %v247
        %v946 = vpop.f32.mrf.mxu0
        %v947 = vadd.f32 %v738, %v946
        %948 = vmatmul.f32.gmra.mxu0 %v251
        %v949 = vpop.f32.mrf.mxu0
        %v950 = vadd.f32 %v741, %v949
        %951 = vmatmul.f32.gmra.mxu0 %v255
        %v952 = vpop.f32.mrf.mxu0
        %v953 = vadd.f32 %v744, %v952
        %954 = vmatmul.f32.gmra.mxu0 %v259
        %v955 = vpop.f32.mrf.mxu0
        %v956 = vadd.f32 %v747, %v955
        %957 = vmatmul.f32.gmra.mxu0 %v263
        %v958 = vpop.f32.mrf.mxu0
        %v959 = vadd.f32 %v750, %v958
        %960 = vmatmul.f32.gmra.mxu0 %v267
        %v961 = vpop.f32.mrf.mxu0
        %v962 = vadd.f32 %v753, %v961
        %963 = vmatmul.f32.gmra.mxu0 %v271
        %v964 = vpop.f32.mrf.mxu0
        %v965 = vadd.f32 %v756, %v964
        %966 = vmatmul.f32.gmra.mxu0 %v275
        %v967 = vpop.f32.mrf.mxu0
        %v968 = vadd.f32 %v759, %v967
        %969 = vmatmul.f32.gmra.mxu0 %v279
        %v970 = vpop.f32.mrf.mxu0
        %v971 = vadd.f32 %v762, %v970
        %972 = vmatmul.f32.gmra.mxu0 %v283
        %v973 = vpop.f32.mrf.mxu0
        %v974 = vadd.f32 %v765, %v973
        %975 = vmatmul.f32.gmra.mxu0 %v287
        %v976 = vpop.f32.mrf.mxu0
        %v977 = vadd.f32 %v768, %v976
        %978 = vmatmul.f32.gmra.mxu0 %v291
        %v979 = vpop.f32.mrf.mxu0
        %v980 = vadd.f32 %v771, %v979
        %981 = vmatmul.f32.gmra.mxu0 %v295
        %v982 = vpop.f32.mrf.mxu0
        %v983 = vadd.f32 %v774, %v982
        %984 = vmatmul.f32.gmra.mxu0 %v299
        %v985 = vpop.f32.mrf.mxu0
        %v986 = vadd.f32 %v777, %v985
        %987 = vmatmul.f32.gmra.mxu0 %v303
        %v988 = vpop.f32.mrf.mxu0
        %v989 = vadd.f32 %v780, %v988
        %990 = vmatmul.f32.gmra.mxu0 %v307
        %v991 = vpop.f32.mrf.mxu0
        %v992 = vadd.f32 %v783, %v991
        %993 = vmatmul.f32.gmra.mxu0 %v311
        %v994 = vpop.f32.mrf.mxu0
        %v995 = vadd.f32 %v786, %v994
        %996 = vmatmul.f32.gmra.mxu0 %v315
        %v997 = vpop.f32.mrf.mxu0
        %v998 = vadd.f32 %v789, %v997
        %999 = vmatmul.f32.gmra.mxu0 %v319
        %v1000 = vpop.f32.mrf.mxu0
        %v1001 = vadd.f32 %v792, %v1000
        %1002 = vmatmul.f32.gmra.mxu0 %v323
        %v1003 = vpop.f32.mrf.mxu0
        %v1004 = vadd.f32 %v795, %v1003
        %1005 = vmatmul.f32.gmra.mxu0 %v327
        %v1006 = vpop.f32.mrf.mxu0
        %v1007 = vadd.f32 %v798, %v1006
        %1008 = vmatmul.f32.gmra.mxu0 %v331
        %v1009 = vpop.f32.mrf.mxu0
        %v1010 = vadd.f32 %v801, %v1009
        %1011 = vmatmul.f32.gmra.mxu0 %v335
        %v1012 = vpop.f32.mrf.mxu0
        %v1013 = vadd.f32 %v804, %v1012
        %1014 = vmatmul.f32.gmra.mxu0 %v339
        %v1015 = vpop.f32.mrf.mxu0
        %v1016 = vadd.f32 %v807, %v1015
        %1017 = vmatmul.f32.gmra.mxu0 %v343
        %v1018 = vpop.f32.mrf.mxu0
        %v1019 = vadd.f32 %v810, %v1018
        %1020 = vmatmul.f32.gmra.mxu0 %v347
        %v1021 = vpop.f32.mrf.mxu0
        %v1022 = vadd.f32 %v813, %v1021
        %1023 = vmatmul.f32.gmra.mxu0 %v351
        %v1024 = vpop.f32.mrf.mxu0
        %v1025 = vadd.f32 %v816, %v1024
        %1026 = vmatmul.f32.gmra.mxu0 %v355
        %v1027 = vpop.f32.mrf.mxu0
        %v1028 = vadd.f32 %v819, %v1027
        %1029 = vmatmul.f32.gmra.mxu0 %v359
        %v1030 = vpop.f32.mrf.mxu0
        %v1031 = vadd.f32 %v822, %v1030
        %1032 = vmatmul.f32.gmra.mxu0 %v363
        %v1033 = vpop.f32.mrf.mxu0
        %v1034 = vadd.f32 %v825, %v1033
        %1035 = vmatmul.f32.gmra.mxu0 %v367
        %v1036 = vpop.f32.mrf.mxu0
        %v1037 = vadd.f32 %v828, %v1036
        %1038 = vmatmul.f32.gmra.mxu0 %v371
        %v1039 = vpop.f32.mrf.mxu0
        %v1040 = vadd.f32 %v831, %v1039
        %1041 = vmatmul.f32.gmra.mxu0 %v375
        %v1042 = vpop.f32.mrf.mxu0
        %v1043 = vadd.f32 %v834, %v1042
        %1044 = vmatmul.f32.gmra.mxu0 %v379
        %v1045 = vpop.f32.mrf.mxu0
        %v1046 = vadd.f32 %v837, %v1045
        %1047 = vmatmul.f32.gmra.mxu0 %v383
        %v1048 = vpop.f32.mrf.mxu0
        %v1049 = vadd.f32 %v840, %v1048
        %1050 = vmatmul.f32.gmra.mxu0 %v387
        %v1051 = vpop.f32.mrf.mxu0
        %v1052 = vadd.f32 %v843, %v1051
        %1053 = vmatmul.f32.gmra.mxu0 %v391
        %v1054 = vpop.f32.mrf.mxu0
        %v1055 = vadd.f32 %v846, %v1054
        %1056 = vmatmul.f32.gmra.mxu0 %v395
        %v1057 = vpop.f32.mrf.mxu0
        %v1058 = vadd.f32 %v849, %v1057
        %1059 = vmatmul.f32.gmra.mxu0 %v399
        %v1060 = vpop.f32.mrf.mxu0
        %v1061 = vadd.f32 %v852, %v1060
        %1062 = vmatmul.f32.gmra.mxu0 %v403
        %v1063 = vpop.f32.mrf.mxu0
        %v1064 = vadd.f32 %v855, %v1063
        %1065 = vmatmul.f32.gmra.mxu0 %v407
        %v1066 = vpop.f32.mrf.mxu0
        %v1067 = vadd.f32 %v858, %v1066
        %1068 = vmatmul.f32.gmra.mxu0 %v411
        %v1069 = vpop.f32.mrf.mxu0
        %v1070 = vadd.f32 %v861, %v1069
        %1071 = vmatmul.f32.gmra.mxu0 %v415
        %v1072 = vpop.f32.mrf.mxu0
        %v1073 = vadd.f32 %v864, %v1072
        %1074 = vmatmul.f32.gmra.mxu0 %v419
        %v1075 = vpop.f32.mrf.mxu0
        %v1076 = vadd.f32 %v867, %v1075
        %1077 = vmatmul.f32.gmra.mxu0 %v423
        %v1078 = vpop.f32.mrf.mxu0
        %v1079 = vadd.f32 %v870, %v1078
        %1080 = vmatmul.f32.gmra.mxu0 %v427
        %v1081 = vpop.f32.mrf.mxu0
        %v1082 = vadd.f32 %v873, %v1081
        %1083 = vmatmul.f32.gmra.mxu0 %v431
        %v1084 = vpop.f32.mrf.mxu0
        %v1085 = vadd.f32 %v876, %v1084
        %1086 = vmatmul.f32.gmra.mxu0 %v435
        %v1087 = vpop.f32.mrf.mxu0
        %v1088 = vadd.f32 %v879, %v1087
        %1089 = vmatmul.f32.gmra.mxu0 %v439
        %v1090 = vpop.f32.mrf.mxu0
        %v1091 = vadd.f32 %v882, %v1090
        %1092 = vmatmul.f32.gmra.mxu0 %v443
        %v1093 = vpop.f32.mrf.mxu0
        %v1094 = vadd.f32 %v885, %v1093
        %1095 = vmatmul.f32.gmra.mxu0 %v447
        %v1096 = vpop.f32.mrf.mxu0
        %v1097 = vadd.f32 %v888, %v1096
        %1098 = vmatmul.f32.gmra.mxu0 %v451
        %v1099 = vpop.f32.mrf.mxu0
        %v1100 = vadd.f32 %v891, %v1099
        %1101 = vmatmul.f32.gmra.mxu0 %v455
        %v1102 = vpop.f32.mrf.mxu0
        %v1103 = vadd.f32 %v894, %v1102
        %1104 = vmatmul.f32.gmra.mxu0 %v459
        %v1105 = vpop.f32.mrf.mxu0
        %v1106 = vadd.f32 %v897, %v1105
        %1107 = vmatmul.f32.gmra.mxu0 %v463
        %v1108 = vpop.f32.mrf.mxu0
        %v1109 = vadd.f32 %v900, %v1108
        %1110 = vmatmul.f32.gmra.mxu0 %v467
        %v1111 = vpop.f32.mrf.mxu0
        %v1112 = vadd.f32 %v903, %v1111
        %1113 = vmatmul.f32.gmra.mxu0 %v471
        %v1114 = vpop.f32.mrf.mxu0
        %v1115 = vadd.f32 %v906, %v1114
        %1116 = vmatmul.f32.gmra.mxu0 %v475
        %v1117 = vpop.f32.mrf.mxu0
        %v1118 = vadd.f32 %v909, %v1117
        %1119 = vmatmul.f32.gmra.mxu0 %v479
        %v1120 = vpop.f32.mrf.mxu0
        %v1121 = vadd.f32 %v912, %v1120
        %1122 = vdwg.mxu0
        %1123 = vmatpush.xpose.msra.mxu0 0.0
        %1124 = vmatpush.xpose.msra.mxu0 0.0
        %1125 = vmatpush.xpose.msra.mxu0 0.0
        %1126 = vmatpush.xpose.msra.mxu0 0.0
        %1127 = vmatpush.xpose.msra.mxu0 0.0
        %1128 = vmatpush.xpose.msra.mxu0 0.0
        %1129 = vmatpush.xpose.msra.mxu0 0.0
        %1130 = vmatpush.xpose.msra.mxu0 0.0
        %1131 = vmatpush.xpose.msra.mxu0 0.0
        %1132 = vmatpush.xpose.msra.mxu0 0.0
        %1133 = vmatpush.xpose.msra.mxu0 0.0
        %1134 = vmatpush.xpose.msra.mxu0 0.0
        %1135 = vmatpush.xpose.msra.mxu0 0.0
        %1136 = vmatpush.xpose.msra.mxu0 0.0
        %1137 = vmatpush.xpose.msra.mxu0 0.0
        %1138 = vmatpush.xpose.msra.mxu0 %v491
        %1139 = vmatmul.f32.gmra.mxu0 %v228
        %v1140 = vpop.f32.mrf.mxu0
        %v1141 = vadd.f32 %v932, %v1140
        %1142 = vmatmul.f32.gmra.mxu0 %v232
        %v1143 = vpop.f32.mrf.mxu0
        %v1144 = vadd.f32 %v935, %v1143
        %1145 = vmatmul.f32.gmra.mxu0 %v236
        %v1146 = vpop.f32.mrf.mxu0
        %v1147 = vadd.f32 %v938, %v1146
        %1148 = vmatmul.f32.gmra.mxu0 %v240
        %v1149 = vpop.f32.mrf.mxu0
        %v1150 = vadd.f32 %v941, %v1149
        %1151 = vmatmul.f32.gmra.mxu0 %v244
        %v1152 = vpop.f32.mrf.mxu0
        %v1153 = vadd.f32 %v944, %v1152
        %1154 = vmatmul.f32.gmra.mxu0 %v248
        %v1155 = vpop.f32.mrf.mxu0
        %v1156 = vadd.f32 %v947, %v1155
        %1157 = vmatmul.f32.gmra.mxu0 %v252
        %v1158 = vpop.f32.mrf.mxu0
        %v1159 = vadd.f32 %v950, %v1158
        %1160 = vmatmul.f32.gmra.mxu0 %v256
        %v1161 = vpop.f32.mrf.mxu0
        %v1162 = vadd.f32 %v953, %v1161
        %1163 = vmatmul.f32.gmra.mxu0 %v260
        %v1164 = vpop.f32.mrf.mxu0
        %v1165 = vadd.f32 %v956, %v1164
        %1166 = vmatmul.f32.gmra.mxu0 %v264
        %v1167 = vpop.f32.mrf.mxu0
        %v1168 = vadd.f32 %v959, %v1167
        %1169 = vmatmul.f32.gmra.mxu0 %v268
        %v1170 = vpop.f32.mrf.mxu0
        %v1171 = vadd.f32 %v962, %v1170
        %1172 = vmatmul.f32.gmra.mxu0 %v272
        %v1173 = vpop.f32.mrf.mxu0
        %v1174 = vadd.f32 %v965, %v1173
        %1175 = vmatmul.f32.gmra.mxu0 %v276
        %v1176 = vpop.f32.mrf.mxu0
        %v1177 = vadd.f32 %v968, %v1176
        %1178 = vmatmul.f32.gmra.mxu0 %v280
        %v1179 = vpop.f32.mrf.mxu0
        %v1180 = vadd.f32 %v971, %v1179
        %1181 = vmatmul.f32.gmra.mxu0 %v284
        %v1182 = vpop.f32.mrf.mxu0
        %v1183 = vadd.f32 %v974, %v1182
        %1184 = vmatmul.f32.gmra.mxu0 %v288
        %v1185 = vpop.f32.mrf.mxu0
        %v1186 = vadd.f32 %v977, %v1185
        %1187 = vmatmul.f32.gmra.mxu0 %v292
        %v1188 = vpop.f32.mrf.mxu0
        %v1189 = vadd.f32 %v980, %v1188
        %1190 = vmatmul.f32.gmra.mxu0 %v296
        %v1191 = vpop.f32.mrf.mxu0
        %v1192 = vadd.f32 %v983, %v1191
        %1193 = vmatmul.f32.gmra.mxu0 %v300
        %v1194 = vpop.f32.mrf.mxu0
        %v1195 = vadd.f32 %v986, %v1194
        %1196 = vmatmul.f32.gmra.mxu0 %v304
        %v1197 = vpop.f32.mrf.mxu0
        %v1198 = vadd.f32 %v989, %v1197
        %1199 = vmatmul.f32.gmra.mxu0 %v308
        %v1200 = vpop.f32.mrf.mxu0
        %v1201 = vadd.f32 %v992, %v1200
        %1202 = vmatmul.f32.gmra.mxu0 %v312
        %v1203 = vpop.f32.mrf.mxu0
        %v1204 = vadd.f32 %v995, %v1203
        %1205 = vmatmul.f32.gmra.mxu0 %v316
        %v1206 = vpop.f32.mrf.mxu0
        %v1207 = vadd.f32 %v998, %v1206
        %1208 = vmatmul.f32.gmra.mxu0 %v320
        %v1209 = vpop.f32.mrf.mxu0
        %v1210 = vadd.f32 %v1001, %v1209
        %1211 = vmatmul.f32.gmra.mxu0 %v324
        %v1212 = vpop.f32.mrf.mxu0
        %v1213 = vadd.f32 %v1004, %v1212
        %1214 = vmatmul.f32.gmra.mxu0 %v328
        %v1215 = vpop.f32.mrf.mxu0
        %v1216 = vadd.f32 %v1007, %v1215
        %1217 = vmatmul.f32.gmra.mxu0 %v332
        %v1218 = vpop.f32.mrf.mxu0
        %v1219 = vadd.f32 %v1010, %v1218
        %1220 = vmatmul.f32.gmra.mxu0 %v336
        %v1221 = vpop.f32.mrf.mxu0
        %v1222 = vadd.f32 %v1013, %v1221
        %1223 = vmatmul.f32.gmra.mxu0 %v340
        %v1224 = vpop.f32.mrf.mxu0
        %v1225 = vadd.f32 %v1016, %v1224
        %1226 = vmatmul.f32.gmra.mxu0 %v344
        %v1227 = vpop.f32.mrf.mxu0
        %v1228 = vadd.f32 %v1019, %v1227
        %1229 = vmatmul.f32.gmra.mxu0 %v348
        %v1230 = vpop.f32.mrf.mxu0
        %v1231 = vadd.f32 %v1022, %v1230
        %1232 = vmatmul.f32.gmra.mxu0 %v352
        %v1233 = vpop.f32.mrf.mxu0
        %v1234 = vadd.f32 %v1025, %v1233
        %1235 = vmatmul.f32.gmra.mxu0 %v356
        %v1236 = vpop.f32.mrf.mxu0
        %v1237 = vadd.f32 %v1028, %v1236
        %1238 = vmatmul.f32.gmra.mxu0 %v360
        %v1239 = vpop.f32.mrf.mxu0
        %v1240 = vadd.f32 %v1031, %v1239
        %1241 = vmatmul.f32.gmra.mxu0 %v364
        %v1242 = vpop.f32.mrf.mxu0
        %v1243 = vadd.f32 %v1034, %v1242
        %1244 = vmatmul.f32.gmra.mxu0 %v368
        %v1245 = vpop.f32.mrf.mxu0
        %v1246 = vadd.f32 %v1037, %v1245
        %1247 = vmatmul.f32.gmra.mxu0 %v372
        %v1248 = vpop.f32.mrf.mxu0
        %v1249 = vadd.f32 %v1040, %v1248
        %1250 = vmatmul.f32.gmra.mxu0 %v376
        %v1251 = vpop.f32.mrf.mxu0
        %v1252 = vadd.f32 %v1043, %v1251
        %1253 = vmatmul.f32.gmra.mxu0 %v380
        %v1254 = vpop.f32.mrf.mxu0
        %v1255 = vadd.f32 %v1046, %v1254
        %1256 = vmatmul.f32.gmra.mxu0 %v384
        %v1257 = vpop.f32.mrf.mxu0
        %v1258 = vadd.f32 %v1049, %v1257
        %1259 = vmatmul.f32.gmra.mxu0 %v388
        %v1260 = vpop.f32.mrf.mxu0
        %v1261 = vadd.f32 %v1052, %v1260
        %1262 = vmatmul.f32.gmra.mxu0 %v392
        %v1263 = vpop.f32.mrf.mxu0
        %v1264 = vadd.f32 %v1055, %v1263
        %1265 = vmatmul.f32.gmra.mxu0 %v396
        %v1266 = vpop.f32.mrf.mxu0
        %v1267 = vadd.f32 %v1058, %v1266
        %1268 = vmatmul.f32.gmra.mxu0 %v400
        %v1269 = vpop.f32.mrf.mxu0
        %v1270 = vadd.f32 %v1061, %v1269
        %1271 = vmatmul.f32.gmra.mxu0 %v404
        %v1272 = vpop.f32.mrf.mxu0
        %v1273 = vadd.f32 %v1064, %v1272
        %1274 = vmatmul.f32.gmra.mxu0 %v408
        %v1275 = vpop.f32.mrf.mxu0
        %v1276 = vadd.f32 %v1067, %v1275
        %1277 = vmatmul.f32.gmra.mxu0 %v412
        %v1278 = vpop.f32.mrf.mxu0
        %v1279 = vadd.f32 %v1070, %v1278
        %1280 = vmatmul.f32.gmra.mxu0 %v416
        %v1281 = vpop.f32.mrf.mxu0
        %v1282 = vadd.f32 %v1073, %v1281
        %1283 = vmatmul.f32.gmra.mxu0 %v420
        %v1284 = vpop.f32.mrf.mxu0
        %v1285 = vadd.f32 %v1076, %v1284
        %1286 = vmatmul.f32.gmra.mxu0 %v424
        %v1287 = vpop.f32.mrf.mxu0
        %v1288 = vadd.f32 %v1079, %v1287
        %1289 = vmatmul.f32.gmra.mxu0 %v428
        %v1290 = vpop.f32.mrf.mxu0
        %v1291 = vadd.f32 %v1082, %v1290
        %1292 = vmatmul.f32.gmra.mxu0 %v432
        %v1293 = vpop.f32.mrf.mxu0
        %v1294 = vadd.f32 %v1085, %v1293
        %1295 = vmatmul.f32.gmra.mxu0 %v436
        %v1296 = vpop.f32.mrf.mxu0
        %v1297 = vadd.f32 %v1088, %v1296
        %1298 = vmatmul.f32.gmra.mxu0 %v440
        %v1299 = vpop.f32.mrf.mxu0
        %v1300 = vadd.f32 %v1091, %v1299
        %1301 = vmatmul.f32.gmra.mxu0 %v444
        %v1302 = vpop.f32.mrf.mxu0
        %v1303 = vadd.f32 %v1094, %v1302
        %1304 = vmatmul.f32.gmra.mxu0 %v448
        %v1305 = vpop.f32.mrf.mxu0
        %v1306 = vadd.f32 %v1097, %v1305
        %1307 = vmatmul.f32.gmra.mxu0 %v452
        %v1308 = vpop.f32.mrf.mxu0
        %v1309 = vadd.f32 %v1100, %v1308
        %1310 = vmatmul.f32.gmra.mxu0 %v456
        %v1311 = vpop.f32.mrf.mxu0
        %v1312 = vadd.f32 %v1103, %v1311
        %1313 = vmatmul.f32.gmra.mxu0 %v460
        %v1314 = vpop.f32.mrf.mxu0
        %v1315 = vadd.f32 %v1106, %v1314
        %1316 = vmatmul.f32.gmra.mxu0 %v464
        %v1317 = vpop.f32.mrf.mxu0
        %v1318 = vadd.f32 %v1109, %v1317
        %1319 = vmatmul.f32.gmra.mxu0 %v468
        %v1320 = vpop.f32.mrf.mxu0
        %v1321 = vadd.f32 %v1112, %v1320
        %1322 = vmatmul.f32.gmra.mxu0 %v472
        %v1323 = vpop.f32.mrf.mxu0
        %v1324 = vadd.f32 %v1115, %v1323
        %1325 = vmatmul.f32.gmra.mxu0 %v476
        %v1326 = vpop.f32.mrf.mxu0
        %v1327 = vadd.f32 %v1118, %v1326
        %1328 = vmatmul.f32.gmra.mxu0 %v480
        %v1329 = vpop.f32.mrf.mxu0
        %v1330 = vadd.f32 %v1121, %v1329
        %1331 = vdwg.mxu0
        %vm1332 = vcmask 15360
        %1333 = vst.msk [vmem:[%s223] sm:$0xff] %vm1332, %v1141
        %1334 = vst.msk [vmem:[%s223 + $0x8] sm:$0xff] %vm1332, %v1144
        %1335 = vst.msk [vmem:[%s223 + $0x10] sm:$0xff] %vm1332, %v1147
        %1336 = vst.msk [vmem:[%s223 + $0x18] sm:$0xff] %vm1332, %v1150
        %1337 = vst.msk [vmem:[%s223 + $0x20] sm:$0xff] %vm1332, %v1153
        %1338 = vst.msk [vmem:[%s223 + $0x28] sm:$0xff] %vm1332, %v1156
        %1339 = vst.msk [vmem:[%s223 + $0x30] sm:$0xff] %vm1332, %v1159
        %1340 = vst.msk [vmem:[%s223 + $0x38] sm:$0xff] %vm1332, %v1162
        %1341 = vst.msk [vmem:[%s223 + $0x40] sm:$0xff] %vm1332, %v1165
        %1342 = vst.msk [vmem:[%s223 + $0x48] sm:$0xff] %vm1332, %v1168
        %1343 = vst.msk [vmem:[%s223 + $0x50] sm:$0xff] %vm1332, %v1171
        %1344 = vst.msk [vmem:[%s223 + $0x58] sm:$0xff] %vm1332, %v1174
        %1345 = vst.msk [vmem:[%s223 + $0x60] sm:$0xff] %vm1332, %v1177
        %1346 = vst.msk [vmem:[%s223 + $0x68] sm:$0xff] %vm1332, %v1180
        %1347 = vst.msk [vmem:[%s223 + $0x70] sm:$0xff] %vm1332, %v1183
        %1348 = vst.msk [vmem:[%s223 + $0x78] sm:$0xff] %vm1332, %v1186
        %1349 = vst.msk [vmem:[%s223 + $0x80] sm:$0xff] %vm1332, %v1189
        %1350 = vst.msk [vmem:[%s223 + $0x88] sm:$0xff] %vm1332, %v1192
        %1351 = vst.msk [vmem:[%s223 + $0x90] sm:$0xff] %vm1332, %v1195
        %1352 = vst.msk [vmem:[%s223 + $0x98] sm:$0xff] %vm1332, %v1198
        %1353 = vst.msk [vmem:[%s223 + $0xa0] sm:$0xff] %vm1332, %v1201
        %1354 = vst.msk [vmem:[%s223 + $0xa8] sm:$0xff] %vm1332, %v1204
        %1355 = vst.msk [vmem:[%s223 + $0xb0] sm:$0xff] %vm1332, %v1207
        %1356 = vst.msk [vmem:[%s223 + $0xb8] sm:$0xff] %vm1332, %v1210
        %1357 = vst.msk [vmem:[%s223 + $0xc0] sm:$0xff] %vm1332, %v1213
        %1358 = vst.msk [vmem:[%s223 + $0xc8] sm:$0xff] %vm1332, %v1216
        %1359 = vst.msk [vmem:[%s223 + $0xd0] sm:$0xff] %vm1332, %v1219
        %1360 = vst.msk [vmem:[%s223 + $0xd8] sm:$0xff] %vm1332, %v1222
        %1361 = vst.msk [vmem:[%s223 + $0xe0] sm:$0xff] %vm1332, %v1225
        %1362 = vst.msk [vmem:[%s223 + $0xe8] sm:$0xff] %vm1332, %v1228
        %1363 = vst.msk [vmem:[%s223 + $0xf0] sm:$0xff] %vm1332, %v1231
        %1364 = vst.msk [vmem:[%s223 + $0xf8] sm:$0xff] %vm1332, %v1234
        %1365 = vst.msk [vmem:[%s223 + $0x100] sm:$0xff] %vm1332, %v1237
        %1366 = vst.msk [vmem:[%s223 + $0x108] sm:$0xff] %vm1332, %v1240
        %1367 = vst.msk [vmem:[%s223 + $0x110] sm:$0xff] %vm1332, %v1243
        %1368 = vst.msk [vmem:[%s223 + $0x118] sm:$0xff] %vm1332, %v1246
        %1369 = vst.msk [vmem:[%s223 + $0x120] sm:$0xff] %vm1332, %v1249
        %1370 = vst.msk [vmem:[%s223 + $0x128] sm:$0xff] %vm1332, %v1252
        %1371 = vst.msk [vmem:[%s223 + $0x130] sm:$0xff] %vm1332, %v1255
        %1372 = vst.msk [vmem:[%s223 + $0x138] sm:$0xff] %vm1332, %v1258
        %1373 = vst.msk [vmem:[%s223 + $0x140] sm:$0xff] %vm1332, %v1261
        %1374 = vst.msk [vmem:[%s223 + $0x148] sm:$0xff] %vm1332, %v1264
        %1375 = vst.msk [vmem:[%s223 + $0x150] sm:$0xff] %vm1332, %v1267
        %1376 = vst.msk [vmem:[%s223 + $0x158] sm:$0xff] %vm1332, %v1270
        %1377 = vst.msk [vmem:[%s223 + $0x160] sm:$0xff] %vm1332, %v1273
        %1378 = vst.msk [vmem:[%s223 + $0x168] sm:$0xff] %vm1332, %v1276
        %1379 = vst.msk [vmem:[%s223 + $0x170] sm:$0xff] %vm1332, %v1279
        %1380 = vst.msk [vmem:[%s223 + $0x178] sm:$0xff] %vm1332, %v1282
        %1381 = vst.msk [vmem:[%s223 + $0x180] sm:$0xff] %vm1332, %v1285
        %1382 = vst.msk [vmem:[%s223 + $0x188] sm:$0xff] %vm1332, %v1288
        %1383 = vst.msk [vmem:[%s223 + $0x190] sm:$0xff] %vm1332, %v1291
        %1384 = vst.msk [vmem:[%s223 + $0x198] sm:$0xff] %vm1332, %v1294
        %1385 = vst.msk [vmem:[%s223 + $0x1a0] sm:$0xff] %vm1332, %v1297
        %1386 = vst.msk [vmem:[%s223 + $0x1a8] sm:$0xff] %vm1332, %v1300
        %1387 = vst.msk [vmem:[%s223 + $0x1b0] sm:$0xff] %vm1332, %v1303
        %1388 = vst.msk [vmem:[%s223 + $0x1b8] sm:$0xff] %vm1332, %v1306
        %1389 = vst.msk [vmem:[%s223 + $0x1c0] sm:$0xff] %vm1332, %v1309
        %1390 = vst.msk [vmem:[%s223 + $0x1c8] sm:$0xff] %vm1332, %v1312
        %1391 = vst.msk [vmem:[%s223 + $0x1d0] sm:$0xff] %vm1332, %v1315
        %1392 = vst.msk [vmem:[%s223 + $0x1d8] sm:$0xff] %vm1332, %v1318
        %1393 = vst.msk [vmem:[%s223 + $0x1e0] sm:$0xff] %vm1332, %v1321
        %1394 = vst.msk [vmem:[%s223 + $0x1e8] sm:$0xff] %vm1332, %v1324
        %1395 = vst.msk [vmem:[%s223 + $0x1f0] sm:$0xff] %vm1332, %v1327
        %1396 = vst.msk [vmem:[%s223 + $0x1f8] sm:$0xff] %vm1332, %v1330
        %s1397 = smul.u32 64, %s18
        %p1398 = scmp.lt.s32.totalorder %s1397, 127
        %s1399 = scalar_select %p1398, %s1397, 127
        %s1400 = smul.addr %s1399, 8
        %s1401 = scalar_lea.vmem %s3, %s1400
        // Predicated region
        $region45: #{fc_layer_forward.1} parent=31 // pred_check
          %p1402 = pneg %p104
        $region46: #{fc_layer_forward.1} parent=31 // pred_check_branch
          %1404 = sbr.rel (%p1402) target = $region48
        $region47: #{fc_layer_forward.1} parent=31 // pred_region
          %s1405 = smul.u32 64, %s18
        $region48: #{fc_layer_forward.1} parent=31 // pred_fallthru
          _
      $region32: #{fc_layer_forward.1} parent=5 // pred_fallthru
        _
      %p1406 = scmp.le.s32.totalorder 2, %s13
      // Predicated region
      $region49: #{fc_layer_forward.1} parent=5 // pred_check
        %p1407 = pneg %p1406
      $region50: #{fc_layer_forward.1} parent=5 // pred_check_branch
        %1409 = sbr.rel (%p1407) target = $region52
      $region51: #{fc_layer_forward.1} parent=5 // pred_region
        %s1410 = ssub.s32 %s13, 2
        // Predicated region
        $region53: #{fc_layer_forward.1} parent=51 // pred_check
          %p1411 = pneg %p110
        $region54: #{fc_layer_forward.1} parent=51 // pred_check_branch
          %1413 = sbr.rel (%p1411) target = $region56
        $region55: #{fc_layer_forward.1} parent=51 // pred_region
          %s1414 = smul.u32 64, %s19
          %p1415 = scmp.lt.s32.totalorder %s1414, 127
          %s1416 = scalar_select %p1415, %s1414, 127
          %s1417 = smul.addr %s1416, 8
          %s1418 = scalar_lea.vmem %s3, %s1417
        $region56: #{fc_layer_forward.1} parent=51 // pred_fallthru
          _
      $region52: #{fc_layer_forward.1} parent=5 // pred_fallthru
        _
    $region6: #{fc_layer_forward.1} parent=1 // loop_footer
      %s17 = sadd.s32 1, %s13
    $region7: #{fc_layer_forward.1} parent=1 // loop_footer_branch
      %12 = sbr.rel target = $region3
    $region8: #{fc_layer_forward.1} parent=1 // loop_exit
      _
    %1419 = vsyncpa [#allocation3], 1
    %s1420 = scalar_lea.sflag [#allocation3], 1
    %1421 = vsyncpa %s1420, 1
    %1422 = vsyncpa [#allocation5], 1

</llo_original>
